<compile_context>
chip_gen: v7x
topology: tpu7x:2x2x1
jax: 0.10.0
libtpu: 0.0.40
codegen_flags: <defaults>
</compile_context>

<pallas_src>
import jax
import jax.numpy as jnp
from jax import lax
from jax.experimental import pallas as pl
from jax.experimental.pallas import tpu as pltpu

NUM_STEPS = 1
STEP_SIZE = 1e-3
EPSILON = 1e-6
NOISE_VAR = 1e-5


def smart_loss_kernel(embed_ref, noise_ref, w_ref, wt_ref, b_ref, out_ref):
    embed = embed_ref[...]                      # [TB, H] f32
    noise = noise_ref[...]                      # [TB, H] f32
    w = w_ref[...]                              # [H, C]  f32 (resident)
    wt = wt_ref[...]                            # [C, H]  f32 (resident, pre-transposed)
    b = b_ref[...]                              # [1, C]  f32 (resident)

    w_bf = w.astype(jnp.bfloat16)
    wt_bf = wt.astype(jnp.bfloat16)

    # ---- state = eval_fn(embed): unperturbed logits, computed once and reused ----
    z0 = jnp.dot(embed.astype(jnp.bfloat16), w_bf,
                 preferred_element_type=jnp.float32) + b                  # [TB, C]
    zm0 = z0 - jnp.max(z0, axis=-1, keepdims=True)
    e0 = jnp.exp(zm0)
    s0 = jnp.sum(e0, axis=-1, keepdims=True)
    q = e0 * pl.reciprocal(s0, approx=True)                               # softmax(state)
    log_q = zm0 - jnp.log(s0)                                             # log_softmax(state)

    def perturbed_softmax(noise_f32):
        # z = (embed + noise) @ W + b = z0 + noise @ W
        zn = jnp.dot(noise_f32.astype(jnp.bfloat16), w_bf,
                     preferred_element_type=jnp.float32)                  # [TB, C]
        z = z0 + zn
        zm = z - jnp.max(z, axis=-1, keepdims=True)
        e = jnp.exp(zm)
        s = jnp.sum(e, axis=-1, keepdims=True)
        p = e * pl.reciprocal(s, approx=True)
        log_p = zm - jnp.log(s)
        return p, log_p

    # ---- num_steps adversarial ascent iterations (closed-form grad) --------------
    def ascent_step(_, noise_c):
        p, log_p = perturbed_softmax(noise_c)
        d = log_p - log_q                                                 # [TB, C]
        kl_pq = jnp.sum(p * d, axis=-1, keepdims=True)                    # [TB, 1]
        g_z = (p - q) + p * (d - kl_pq)                                   # dL/dz
        g_noise = jnp.dot(g_z.astype(jnp.bfloat16), wt_bf,
                          preferred_element_type=jnp.float32)             # dL/dnoise = g_z @ W^T
        step = noise_c + STEP_SIZE * g_noise
        step_norm = jnp.max(jnp.abs(step), axis=-1, keepdims=True)        # inf norm
        return step * pl.reciprocal(step_norm + EPSILON, approx=True)

    noise = lax.fori_loop(0, NUM_STEPS, ascent_step, noise, unroll=True)

    # ---- final evaluation + loss_last_fn (symmetric KL, sum reduction) -----------
    p, log_p = perturbed_softmax(noise)
    d = log_p - log_q
    # sum q*(log q - log p) + sum p*(log p - log q) = sum (p - q) * d
    tile_loss = jnp.sum((p - q) * d)

    # Lane-dense store: scalar partial in lane 0 of a full 128-lane row.
    lane = lax.broadcasted_iota(jnp.int32, out_ref.shape, out_ref.ndim - 1)
    out_ref[...] = jnp.where(lane == 0, tile_loss, 0.0)


def smart_loss(embed, w, b, noise, *, tb=128):
    """SMART loss for a linear eval head.

    embed: [B, H], w: [H, C], b: [1, C], noise: [B, H] (pre-scaled by noise_var).
    The reference logits `state` = eval_fn(embed) are recomputed in-kernel.
    tb: batch tile (multiple of 8; 128 fills the v5e MXU, 256 is ideal on v6e/v7x).
    """
    B, H = embed.shape
    _, C = w.shape

    num_tiles = pl.cdiv(B, tb)
    Bp = num_tiles * tb
    if Bp != B:
        # Zero-padded rows contribute exactly 0 to the loss (p == q, grad == 0).
        pad = Bp - B
        embed = jnp.pad(embed, ((0, pad), (0, 0)))
        noise = jnp.pad(noise, ((0, pad), (0, 0)))

    w_t = w.T  # transpose once outside the kernel; resident in VMEM

    partials = pl.pallas_call(
        smart_loss_kernel,
        out_shape=jax.ShapeDtypeStruct((num_tiles, 1, 128), jnp.float32),
        grid_spec=pltpu.PrefetchScalarGridSpec(
            num_scalar_prefetch=0,
            grid=(num_tiles,),
            in_specs=[
                pl.BlockSpec((tb, H), lambda i: (i, 0)),   # embed tile (streamed)
                pl.BlockSpec((tb, H), lambda i: (i, 0)),   # noise tile (streamed)
                pl.BlockSpec((H, C), lambda i: (0, 0)),    # W      (resident)
                pl.BlockSpec((C, H), lambda i: (0, 0)),    # W^T    (resident)
                pl.BlockSpec((1, C), lambda i: (0, 0)),    # b      (resident)
            ],
            out_specs=pl.BlockSpec((1, 1, 128), lambda i: (i, 0, 0)),
        ),
        compiler_params=pltpu.CompilerParams(
            dimension_semantics=("parallel",),             # v7x: shard batch tiles across TCs
        ),
    )(embed, noise, w, w_t, b)

    return jnp.sum(partials)


if __name__ == "__main__":
    # B = batch*seq rows, H = hidden, C = classes of the linear eval head.
    B, H, C = 256, 128, 8
    TB = 128

    key = jax.random.PRNGKey(0)
    k_embed, k_w, k_noise = jax.random.split(key, 3)

    embed = jax.random.normal(k_embed, (B, H), jnp.float32)
    w = jax.random.normal(k_w, (H, C), jnp.float32) * 0.1   # deterministic "init"
    b = jnp.zeros((1, C), jnp.float32)

    # noise = randn_like(embed) * noise_var (generated in the wrapper, like torch).
    noise = jax.random.normal(k_noise, (B, H), jnp.float32) * NOISE_VAR

    loss = smart_loss(embed, w, b, noise, tb=TB)
    loss = jax.block_until_ready(loss)
    assert bool(jnp.isfinite(loss))
    print("KERNEL_OK")
</pallas_src>

<mosaic_0001>
module attributes {stable_mosaic.version = 11 : i64} {
  func.func @smart_loss_kernel(%arg0: i32, %arg1: memref<128x128xf32, #tpu.memory_space<vmem>>, %arg2: memref<128x128xf32, #tpu.memory_space<vmem>>, %arg3: memref<128x8xf32, #tpu.memory_space<vmem>>, %arg4: memref<8x128xf32, #tpu.memory_space<vmem>>, %arg5: memref<1x8xf32, #tpu.memory_space<vmem>>, %arg6: memref<1x1x128xf32, #tpu.memory_space<vmem>>) attributes {dimension_semantics = [#tpu.dimension_semantics<parallel>], iteration_bounds = array<i64: 2>, scalar_prefetch = 0 : i64, scratch_operands = 0 : i64, tpu.core_type = #tpu.core_type<tc>, window_params = [{transform_indices = @transform_0, window_bounds = array<i64: 128, 128>}, {transform_indices = @transform_1, window_bounds = array<i64: 128, 128>}, {pipeline_mode = #tpu.pipeline_mode<synchronous>, transform_indices = @transform_2, window_bounds = array<i64: 128, 8>}, {pipeline_mode = #tpu.pipeline_mode<synchronous>, transform_indices = @transform_3, window_bounds = array<i64: 8, 128>}, {pipeline_mode = #tpu.pipeline_mode<synchronous>, transform_indices = @transform_4, window_bounds = array<i64: 1, 8>}, {transform_indices = @transform_5, window_bounds = array<i64: 1, 1, 128>}]} {
    %c0 = arith.constant 0 : index
    %c0_0 = arith.constant 0 : index
    %0 = vector.load %arg1[%c0, %c0_0] : memref<128x128xf32, #tpu.memory_space<vmem>>, vector<128x128xf32>
    %c0_1 = arith.constant 0 : index
    %c0_2 = arith.constant 0 : index
    %1 = vector.load %arg2[%c0_1, %c0_2] : memref<128x128xf32, #tpu.memory_space<vmem>>, vector<128x128xf32>
    %c0_3 = arith.constant 0 : index
    %c0_4 = arith.constant 0 : index
    %2 = vector.load %arg3[%c0_3, %c0_4] : memref<128x8xf32, #tpu.memory_space<vmem>>, vector<128x8xf32>
    %c0_5 = arith.constant 0 : index
    %c0_6 = arith.constant 0 : index
    %3 = vector.load %arg4[%c0_5, %c0_6] : memref<8x128xf32, #tpu.memory_space<vmem>>, vector<8x128xf32>
    %c0_7 = arith.constant 0 : index
    %c0_8 = arith.constant 0 : index
    %4 = vector.load %arg5[%c0_7, %c0_8] : memref<1x8xf32, #tpu.memory_space<vmem>>, vector<1x8xf32>
    %5 = arith.truncf %2 : vector<128x8xf32> to vector<128x8xbf16>
    %6 = arith.truncf %3 : vector<8x128xf32> to vector<8x128xbf16>
    %7 = arith.truncf %0 : vector<128x128xf32> to vector<128x128xbf16>
    %cst = arith.constant dense<0.000000e+00> : vector<128x8xf32>
    %8 = tpu.matmul %7, %5, %cst {dimension_numbers = #tpu.dot_dimension_numbers<[1], [0], [0], [1], [0, 0, 1, 1], [], []>} : vector<128x128xbf16>, vector<128x8xbf16>, vector<128x8xf32> -> vector<128x8xf32>
    %9 = vector.broadcast %4 : vector<1x8xf32> to vector<128x8xf32>
    %10 = arith.addf %8, %9 : vector<128x8xf32>
    %cst_9 = arith.constant dense<0xFF800000> : vector<128xf32>
    %11 = vector.multi_reduction <maximumf>, %10, %cst_9 [1] : vector<128x8xf32> to vector<128xf32>
    %12 = vector.shape_cast %11 : vector<128xf32> to vector<128x1xf32>
    %13 = vector.broadcast %12 : vector<128x1xf32> to vector<128x8xf32>
    %14 = arith.subf %10, %13 : vector<128x8xf32>
    %15 = math.exp %14 : vector<128x8xf32>
    %cst_10 = arith.constant dense<0.000000e+00> : vector<128xf32>
    %16 = vector.multi_reduction <add>, %15, %cst_10 [1] : vector<128x8xf32> to vector<128xf32>
    %17 = vector.shape_cast %16 : vector<128xf32> to vector<128x1xf32>
    %18 = tpu.reciprocal %17 {approx = true} : vector<128x1xf32> -> vector<128x1xf32>
    %19 = vector.broadcast %18 : vector<128x1xf32> to vector<128x8xf32>
    %20 = arith.mulf %15, %19 : vector<128x8xf32>
    %21 = math.log %17 : vector<128x1xf32>
    %22 = vector.broadcast %21 : vector<128x1xf32> to vector<128x8xf32>
    %23 = arith.subf %14, %22 : vector<128x8xf32>
    %c0_i32 = arith.constant 0 : i32
    %24 = arith.truncf %1 : vector<128x128xf32> to vector<128x128xbf16>
    %cst_11 = arith.constant dense<0.000000e+00> : vector<128x8xf32>
    %25 = tpu.matmul %24, %5, %cst_11 {dimension_numbers = #tpu.dot_dimension_numbers<[1], [0], [0], [1], [0, 0, 1, 1], [], []>} : vector<128x128xbf16>, vector<128x8xbf16>, vector<128x8xf32> -> vector<128x8xf32>
    %26 = arith.addf %10, %25 : vector<128x8xf32>
    %cst_12 = arith.constant dense<0xFF800000> : vector<128xf32>
    %27 = vector.multi_reduction <maximumf>, %26, %cst_12 [1] : vector<128x8xf32> to vector<128xf32>
    %28 = vector.shape_cast %27 : vector<128xf32> to vector<128x1xf32>
    %29 = vector.broadcast %28 : vector<128x1xf32> to vector<128x8xf32>
    %30 = arith.subf %26, %29 : vector<128x8xf32>
    %31 = math.exp %30 : vector<128x8xf32>
    %cst_13 = arith.constant dense<0.000000e+00> : vector<128xf32>
    %32 = vector.multi_reduction <add>, %31, %cst_13 [1] : vector<128x8xf32> to vector<128xf32>
    %33 = vector.shape_cast %32 : vector<128xf32> to vector<128x1xf32>
    %34 = tpu.reciprocal %33 {approx = true} : vector<128x1xf32> -> vector<128x1xf32>
    %35 = vector.broadcast %34 : vector<128x1xf32> to vector<128x8xf32>
    %36 = arith.mulf %31, %35 : vector<128x8xf32>
    %37 = math.log %33 : vector<128x1xf32>
    %38 = vector.broadcast %37 : vector<128x1xf32> to vector<128x8xf32>
    %39 = arith.subf %30, %38 : vector<128x8xf32>
    %40 = arith.subf %39, %23 : vector<128x8xf32>
    %41 = arith.mulf %36, %40 : vector<128x8xf32>
    %cst_14 = arith.constant dense<0.000000e+00> : vector<128xf32>
    %42 = vector.multi_reduction <add>, %41, %cst_14 [1] : vector<128x8xf32> to vector<128xf32>
    %43 = vector.shape_cast %42 : vector<128xf32> to vector<128x1xf32>
    %44 = arith.subf %36, %20 : vector<128x8xf32>
    %45 = vector.broadcast %43 : vector<128x1xf32> to vector<128x8xf32>
    %46 = arith.subf %40, %45 : vector<128x8xf32>
    %47 = arith.mulf %36, %46 : vector<128x8xf32>
    %48 = arith.addf %44, %47 : vector<128x8xf32>
    %49 = arith.truncf %48 : vector<128x8xf32> to vector<128x8xbf16>
    %cst_15 = arith.constant dense<0.000000e+00> : vector<128x128xf32>
    %50 = tpu.matmul %49, %6, %cst_15 {dimension_numbers = #tpu.dot_dimension_numbers<[1], [0], [0], [1], [0, 0, 1, 1], [], []>} : vector<128x8xbf16>, vector<8x128xbf16>, vector<128x128xf32> -> vector<128x128xf32>
    %cst_16 = arith.constant 1.000000e-03 : f32
    %51 = vector.broadcast %cst_16 : f32 to vector<128x128xf32>
    %52 = arith.mulf %51, %50 : vector<128x128xf32>
    %53 = arith.addf %1, %52 : vector<128x128xf32>
    %54 = math.absf %53 : vector<128x128xf32>
    %cst_17 = arith.constant dense<0xFF800000> : vector<128xf32>
    %55 = vector.multi_reduction <maximumf>, %54, %cst_17 [1] : vector<128x128xf32> to vector<128xf32>
    %56 = vector.shape_cast %55 : vector<128xf32> to vector<128x1xf32>
    %cst_18 = arith.constant 9.99999997E-7 : f32
    %57 = vector.broadcast %cst_18 : f32 to vector<128x1xf32>
    %58 = arith.addf %56, %57 : vector<128x1xf32>
    %59 = tpu.reciprocal %58 {approx = true} : vector<128x1xf32> -> vector<128x1xf32>
    %60 = vector.broadcast %59 : vector<128x1xf32> to vector<128x128xf32>
    %61 = arith.mulf %53, %60 : vector<128x128xf32>
    %62 = arith.truncf %61 : vector<128x128xf32> to vector<128x128xbf16>
    %cst_19 = arith.constant dense<0.000000e+00> : vector<128x8xf32>
    %63 = tpu.matmul %62, %5, %cst_19 {dimension_numbers = #tpu.dot_dimension_numbers<[1], [0], [0], [1], [0, 0, 1, 1], [], []>} : vector<128x128xbf16>, vector<128x8xbf16>, vector<128x8xf32> -> vector<128x8xf32>
    %64 = arith.addf %10, %63 : vector<128x8xf32>
    %cst_20 = arith.constant dense<0xFF800000> : vector<128xf32>
    %65 = vector.multi_reduction <maximumf>, %64, %cst_20 [1] : vector<128x8xf32> to vector<128xf32>
    %66 = vector.shape_cast %65 : vector<128xf32> to vector<128x1xf32>
    %67 = vector.broadcast %66 : vector<128x1xf32> to vector<128x8xf32>
    %68 = arith.subf %64, %67 : vector<128x8xf32>
    %69 = math.exp %68 : vector<128x8xf32>
    %cst_21 = arith.constant dense<0.000000e+00> : vector<128xf32>
    %70 = vector.multi_reduction <add>, %69, %cst_21 [1] : vector<128x8xf32> to vector<128xf32>
    %71 = vector.shape_cast %70 : vector<128xf32> to vector<128x1xf32>
    %72 = tpu.reciprocal %71 {approx = true} : vector<128x1xf32> -> vector<128x1xf32>
    %73 = vector.broadcast %72 : vector<128x1xf32> to vector<128x8xf32>
    %74 = arith.mulf %69, %73 : vector<128x8xf32>
    %75 = math.log %71 : vector<128x1xf32>
    %76 = vector.broadcast %75 : vector<128x1xf32> to vector<128x8xf32>
    %77 = arith.subf %68, %76 : vector<128x8xf32>
    %78 = arith.subf %77, %23 : vector<128x8xf32>
    %79 = arith.subf %74, %20 : vector<128x8xf32>
    %80 = arith.mulf %79, %78 : vector<128x8xf32>
    %81 = vector.shape_cast %80 : vector<128x8xf32> to vector<1x128x8xf32>
    %cst_22 = arith.constant dense<0.000000e+00> : vector<1xf32>
    %82 = vector.multi_reduction <add>, %81, %cst_22 [1, 2] : vector<1x128x8xf32> to vector<1xf32>
    %83 = vector.shape_cast %82 : vector<1xf32> to vector<1x1x1xf32>
    %84 = vector.extract %83[0, 0, 0] : f32 from vector<1x1x1xf32>
    %85 = tpu.iota {dimensions = array<i32: 2>} : vector<1x1x128xi32>
    %c0_i32_23 = arith.constant 0 : i32
    %86 = vector.broadcast %c0_i32_23 : i32 to vector<1x1x128xi32>
    %87 = arith.cmpi eq, %85, %86 : vector<1x1x128xi32>
    %cst_24 = arith.constant 0.000000e+00 : f32
    %88 = vector.broadcast %84 : f32 to vector<1x1x128xf32>
    %89 = vector.broadcast %cst_24 : f32 to vector<1x1x128xf32>
    %90 = arith.select %87, %88, %89 : vector<1x1x128xi1>, vector<1x1x128xf32>
    %c0_25 = arith.constant 0 : index
    %c0_26 = arith.constant 0 : index
    %c0_27 = arith.constant 0 : index
    %91 = vector.load %arg6[%c0_25, %c0_26, %c0_27] : memref<1x1x128xf32, #tpu.memory_space<vmem>>, vector<1x1x128xf32>
    tpu.vector_store %arg6[%c0_25, %c0_26, %c0_27], %90 {strides = array<i32>} : memref<1x1x128xf32, #tpu.memory_space<vmem>>, vector<1x1x128xf32>,
    return
  }
  func.func @transform_0(%arg0: i32) -> (i32, i32) {
    %c0_i32 = arith.constant 0 : i32
    %c0_i32_0 = arith.constant 0 : i32
    return %arg0, %c0_i32 : i32, i32
  }
  func.func @transform_1(%arg0: i32) -> (i32, i32) {
    %c0_i32 = arith.constant 0 : i32
    %c0_i32_0 = arith.constant 0 : i32
    return %arg0, %c0_i32 : i32, i32
  }
  func.func @transform_2(%arg0: i32) -> (i32, i32) {
    %c0_i32 = arith.constant 0 : i32
    %c0_i32_0 = arith.constant 0 : i32
    %c0_i32_1 = arith.constant 0 : i32
    return %c0_i32, %c0_i32_0 : i32, i32
  }
  func.func @transform_3(%arg0: i32) -> (i32, i32) {
    %c0_i32 = arith.constant 0 : i32
    %c0_i32_0 = arith.constant 0 : i32
    %c0_i32_1 = arith.constant 0 : i32
    return %c0_i32, %c0_i32_0 : i32, i32
  }
  func.func @transform_4(%arg0: i32) -> (i32, i32) {
    %c0_i32 = arith.constant 0 : i32
    %c0_i32_0 = arith.constant 0 : i32
    %c0_i32_1 = arith.constant 0 : i32
    return %c0_i32, %c0_i32_0 : i32, i32
  }
  func.func @transform_5(%arg0: i32) -> (i32, i32, i32) {
    %c0_i32 = arith.constant 0 : i32
    %c0_i32_0 = arith.constant 0 : i32
    %c0_i32_1 = arith.constant 0 : i32
    return %arg0, %c0_i32, %c0_i32_0 : i32, i32, i32
  }
}

</mosaic_0001>

<llo_original>
// kernel: tpu_custom_call.1
$region0: #{tpu_custom_call.1}
  #allocation0 [shape = 'u32[]', space=smem, size = 0x4, offset = 0x4, fixed_abs, tag = 'smem constant byte address 0x4 - core index']
  #allocation1 [shape = 'u32[144,128]{1,0:T(1,128)}', space=vmem, size = 0x12000, scoped, tag = 'internal scratch']
  %s0 = inlined_call_operand.hbm [shape: f32[256,128], index: 0, kind: input, shape index: {}]
  %s1 = inlined_call_operand.hbm [shape: f32[256,128], index: 1, kind: input, shape index: {}]
  %s2 = inlined_call_operand.vmem [shape: f32[128,8], index: 2, kind: input, shape index: {}]
  %s3 = inlined_call_operand.vmem [shape: f32[8,128], index: 3, kind: input, shape index: {}]
  %s4 = inlined_call_operand.vmem [shape: f32[1,8], index: 4, kind: input, shape index: {}]
  %s5 = inlined_call_operand.hbm [shape: f32[2,1,128], index: 5, kind: output, shape index: {}]
  %s6 = sld [smem:[#allocation0]]
  $region61: #{tpu_custom_call.1} parent=0
    _
  %s8 = ssub.s32 1, %s6
  %s9 = scalar_select 0, %s8, %s6
  $region1: #{tpu_custom_call.1} parent=0
    #allocation2 [shape = 'u8[131072]{0}', space=vmem, size = 0x20000, scoped, tag = 'input window, operand 0']
    #allocation3 [shape = 's32[2]{0}', space=sflag, size = 0x8, scoped, tag = 'scoped memory for tpu_custom_call.1']
    #allocation4 [shape = 's32[2]{0}', space=sflag, size = 0x8, scoped, tag = 'scoped memory for tpu_custom_call.1']
    #allocation5 [shape = 'u8[131072]{0}', space=vmem, size = 0x20000, scoped, tag = 'input window, operand 1']
    #allocation6 [shape = 's32[2]{0}', space=sflag, size = 0x8, scoped, tag = 'scoped memory for tpu_custom_call.1']
    #allocation7 [shape = 'u8[1024]{0}', space=vmem, size = 0x400, scoped, tag = 'output window, operand 0']
    %10 = vsyncpa [#allocation3], 0
    %s11 = scalar_lea.sflag [#allocation3], 1
    %12 = vsyncpa %s11, 0
    %13 = vsyncpa [#allocation6], 0
    %s14 = scalar_lea.sflag [#allocation6], 1
    %15 = vsyncpa %s14, 0
    %16 = vsyncpa [#allocation4], 0
    %s17 = scalar_lea.sflag [#allocation4], 1
    %18 = vsyncpa %s17, 0
    loop: start=0, step=1, limit=4
    $region2: #{tpu_custom_call.1} parent=1 // loop_pre_header
      _
    $region3: #{tpu_custom_call.1} parent=1 // loop_header
      %s20 = sphi 0, %s24
      %p21 = scmp.ge.s32.totalorder %s20, 4
      %s30 = sphi 0, %s32
      %s33 = sphi 0, %s30
      %s34 = sphi 0, %s33
      %s50 = sphi 0, %s34
      %s56 = sphi 0, %s58
      %s59 = sphi 0, %s56
      %s60 = sphi 0, %s59
      %s76 = sphi 0, %s60
      %s80 = sphi 0, %s80
      %s82 = sphi 0, %s80
      %s83 = sphi 0, %s82
      %s97 = sphi 0, %s83
      %s101 = sphi 0, %s101
      %s103 = sphi 0, %s101
      %s104 = sphi 0, %s103
      %s118 = sphi 0, %s104
      %s122 = sphi 0, %s122
      %s124 = sphi 0, %s122
      %s125 = sphi 0, %s124
      %s139 = sphi 0, %s125
      %s145 = sphi 0, %s147
      %s148 = sphi 0, %s145
      %s149 = sphi 0, %s148
      %s165 = sphi 0, %s149
    $region4: #{tpu_custom_call.1} parent=1 // loop_header_branch
      %23 = sbr.rel (%p21) target = $region8
    $region5: #{tpu_custom_call.1} parent=1 // loop_body
      %s25 = ssub.s32 %s20, 1
      %s26 = ssub.s32 %s20, 2
      %s27 = sadd.s32 %s20, 1
      %s28 = ssub.s32 %s20, %s27
      %p29 = scmp.eq.s32.totalorder %s28, 0
      %s31 = sadd.s32 %s30, 1
      %s32 = scalar_select %p29, %s30, %s31
      %p35 = pneg %p29
      %p36 = scmp.eq.s32.totalorder %s20, 1
      %p37 = por %p35, %p36
      %p38 = scmp.ne.s32.totalorder %s30, %s33
      %p39 = scmp.eq.s32.totalorder %s20, 0
      %p40 = por %p38, %p39
      %p41 = scmp.ne.s32.totalorder %s30, %s33
      %p42 = scmp.eq.s32.totalorder %s25, 1
      %p43 = por %p41, %p42
      %p44 = scmp.ne.s32.totalorder %s33, %s34
      %p45 = scmp.eq.s32.totalorder %s25, 0
      %p46 = por %p44, %p45
      %p47 = scmp.ne.s32.totalorder %s33, %s34
      %p48 = scmp.eq.s32.totalorder %s26, 1
      %p49 = por %p47, %p48
      %p51 = scmp.ne.s32.totalorder %s34, %s50
      %p52 = scmp.eq.s32.totalorder %s26, 0
      %p53 = por %p51, %p52
      %s54 = ssub.s32 %s20, %s27
      %p55 = scmp.eq.s32.totalorder %s54, 0
      %s57 = sadd.s32 %s56, 1
      %s58 = scalar_select %p55, %s56, %s57
      %p61 = pneg %p55
      %p62 = scmp.eq.s32.totalorder %s20, 1
      %p63 = por %p61, %p62
      %p64 = scmp.ne.s32.totalorder %s56, %s59
      %p65 = scmp.eq.s32.totalorder %s20, 0
      %p66 = por %p64, %p65
      %p67 = scmp.ne.s32.totalorder %s56, %s59
      %p68 = scmp.eq.s32.totalorder %s25, 1
      %p69 = por %p67, %p68
      %p70 = scmp.ne.s32.totalorder %s59, %s60
      %p71 = scmp.eq.s32.totalorder %s25, 0
      %p72 = por %p70, %p71
      %p73 = scmp.ne.s32.totalorder %s59, %s60
      %p74 = scmp.eq.s32.totalorder %s26, 1
      %p75 = por %p73, %p74
      %p77 = scmp.ne.s32.totalorder %s60, %s76
      %p78 = scmp.eq.s32.totalorder %s26, 0
      %p79 = por %p77, %p78
      %s81 = sadd.s32 %s80, 1
      %p84 = scmp.eq.s32.totalorder %s20, 1
      %p85 = scmp.ne.s32.totalorder %s80, %s82
      %p86 = scmp.eq.s32.totalorder %s20, 0
      %p87 = por %p85, %p86
      %p88 = scmp.ne.s32.totalorder %s80, %s82
      %p89 = scmp.eq.s32.totalorder %s25, 1
      %p90 = por %p88, %p89
      %p91 = scmp.ne.s32.totalorder %s82, %s83
      %p92 = scmp.eq.s32.totalorder %s25, 0
      %p93 = por %p91, %p92
      %p94 = scmp.ne.s32.totalorder %s82, %s83
      %p95 = scmp.eq.s32.totalorder %s26, 1
      %p96 = por %p94, %p95
      %p98 = scmp.ne.s32.totalorder %s83, %s97
      %p99 = scmp.eq.s32.totalorder %s26, 0
      %p100 = por %p98, %p99
      %s102 = sadd.s32 %s101, 1
      %p105 = scmp.eq.s32.totalorder %s20, 1
      %p106 = scmp.ne.s32.totalorder %s101, %s103
      %p107 = scmp.eq.s32.totalorder %s20, 0
      %p108 = por %p106, %p107
      %p109 = scmp.ne.s32.totalorder %s101, %s103
      %p110 = scmp.eq.s32.totalorder %s25, 1
      %p111 = por %p109, %p110
      %p112 = scmp.ne.s32.totalorder %s103, %s104
      %p113 = scmp.eq.s32.totalorder %s25, 0
      %p114 = por %p112, %p113
      %p115 = scmp.ne.s32.totalorder %s103, %s104
      %p116 = scmp.eq.s32.totalorder %s26, 1
      %p117 = por %p115, %p116
      %p119 = scmp.ne.s32.totalorder %s104, %s118
      %p120 = scmp.eq.s32.totalorder %s26, 0
      %p121 = por %p119, %p120
      %s123 = sadd.s32 %s122, 1
      %p126 = scmp.eq.s32.totalorder %s20, 1
      %p127 = scmp.ne.s32.totalorder %s122, %s124
      %p128 = scmp.eq.s32.totalorder %s20, 0
      %p129 = por %p127, %p128
      %p130 = scmp.ne.s32.totalorder %s122, %s124
      %p131 = scmp.eq.s32.totalorder %s25, 1
      %p132 = por %p130, %p131
      %p133 = scmp.ne.s32.totalorder %s124, %s125
      %p134 = scmp.eq.s32.totalorder %s25, 0
      %p135 = por %p133, %p134
      %p136 = scmp.ne.s32.totalorder %s124, %s125
      %p137 = scmp.eq.s32.totalorder %s26, 1
      %p138 = por %p136, %p137
      %p140 = scmp.ne.s32.totalorder %s125, %s139
      %p141 = scmp.eq.s32.totalorder %s26, 0
      %p142 = por %p140, %p141
      %s143 = ssub.s32 %s20, %s27
      %p144 = scmp.eq.s32.totalorder %s143, 0
      %s146 = sadd.s32 %s145, 1
      %s147 = scalar_select %p144, %s145, %s146
      %p150 = pneg %p144
      %p151 = scmp.eq.s32.totalorder %s20, 1
      %p152 = por %p150, %p151
      %p153 = scmp.ne.s32.totalorder %s145, %s148
      %p154 = scmp.eq.s32.totalorder %s20, 0
      %p155 = por %p153, %p154
      %p156 = scmp.ne.s32.totalorder %s145, %s148
      %p157 = scmp.eq.s32.totalorder %s25, 1
      %p158 = por %p156, %p157
      %p159 = scmp.ne.s32.totalorder %s148, %s149
      %p160 = scmp.eq.s32.totalorder %s25, 0
      %p161 = por %p159, %p160
      %p162 = scmp.ne.s32.totalorder %s148, %s149
      %p163 = scmp.eq.s32.totalorder %s26, 1
      %p164 = por %p162, %p163
      %p166 = scmp.ne.s32.totalorder %s149, %s165
      %p167 = scmp.eq.s32.totalorder %s26, 0
      %p168 = por %p166, %p167
      %p169 = scmp.le.s32.totalorder 1, %s20
      %p170 = scmp.lt.s32.totalorder %s20, 3
      %p171 = pnand %p169, %p170
      %p172 = pneg %p171
      // Predicated region
      $region9: #{tpu_custom_call.1} parent=5 // pred_check
        _
      $region10: #{tpu_custom_call.1} parent=5 // pred_check_branch
        %174 = sbr.rel (%p171) target = $region12
      $region11: #{tpu_custom_call.1} parent=5 // pred_region
        %s175 = ssub.s32 %s20, 1
        // Predicated region
        $region13: #{tpu_custom_call.1} parent=11 // pred_check
          %p176 = pneg %p93
        $region14: #{tpu_custom_call.1} parent=11 // pred_check_branch
          %178 = sbr.rel (%p176) target = $region16
        $region15: #{tpu_custom_call.1} parent=11 // pred_region
          _
        $region16: #{tpu_custom_call.1} parent=11 // pred_fallthru
          _
        // Predicated region
        $region17: #{tpu_custom_call.1} parent=11 // pred_check
          %p179 = pneg %p114
        $region18: #{tpu_custom_call.1} parent=11 // pred_check_branch
          %181 = sbr.rel (%p179) target = $region20
        $region19: #{tpu_custom_call.1} parent=11 // pred_region
          _
        $region20: #{tpu_custom_call.1} parent=11 // pred_fallthru
          _
        // Predicated region
        $region21: #{tpu_custom_call.1} parent=11 // pred_check
          %p182 = pneg %p135
        $region22: #{tpu_custom_call.1} parent=11 // pred_check_branch
          %184 = sbr.rel (%p182) target = $region24
        $region23: #{tpu_custom_call.1} parent=11 // pred_region
          _
        $region24: #{tpu_custom_call.1} parent=11 // pred_fallthru
          _
      $region12: #{tpu_custom_call.1} parent=5 // pred_fallthru
        _
      %p185 = scmp.lt.s32.totalorder %s20, 2
      // Predicated region
      $region25: #{tpu_custom_call.1} parent=5 // pred_check
        %p186 = pneg %p185
      $region26: #{tpu_custom_call.1} parent=5 // pred_check_branch
        %188 = sbr.rel (%p186) target = $region28
      $region27: #{tpu_custom_call.1} parent=5 // pred_region
        // Predicated region
        $region29: #{tpu_custom_call.1} parent=27 // pred_check
          %p189 = pneg %p40
        $region30: #{tpu_custom_call.1} parent=27 // pred_check_branch
          %191 = sbr.rel (%p189) target = $region32
        $region31: #{tpu_custom_call.1} parent=27 // pred_region
          %s192 = sand.u32 %s30, 1
          %s193 = scalar_lea.sflag [#allocation3], %s192
          %s194 = sand.u32 %s30, 1
          %s195 = smul.addr %s194, 128
          %s196 = scalar_lea.vmem [#allocation2], %s195
          %s197 = smul.u32 16, %s20
          %s199 = ssub.s32 2048, 2048
          %200 = vsyncadd %s193, %s199
          %s201 = smul.addr %s197, 128
          %s202 = scalar_lea.hbm %s0, %s201
          %s203 = sshll.u32 %s196, 4
          %s204 = int_to_ptr.vmem [resolvable:$true] %s203
          %209 = dma.hbm_to_vmem [thread:$0]  %s202, 2048, %s204, %s193, 128, 128, 8
        $region32: #{tpu_custom_call.1} parent=27 // pred_fallthru
          _
        // Predicated region
        $region33: #{tpu_custom_call.1} parent=27 // pred_check
          %p210 = pneg %p66
        $region34: #{tpu_custom_call.1} parent=27 // pred_check_branch
          %212 = sbr.rel (%p210) target = $region36
        $region35: #{tpu_custom_call.1} parent=27 // pred_region
          %s213 = sand.u32 %s56, 1
          %s214 = scalar_lea.sflag [#allocation6], %s213
          %s215 = sand.u32 %s56, 1
          %s216 = smul.addr %s215, 128
          %s217 = scalar_lea.vmem [#allocation5], %s216
          %s218 = smul.u32 16, %s20
          %s220 = ssub.s32 2048, 2048
          %221 = vsyncadd %s214, %s220
          %s222 = smul.addr %s218, 128
          %s223 = scalar_lea.hbm %s1, %s222
          %s224 = sshll.u32 %s217, 4
          %s225 = int_to_ptr.vmem [resolvable:$true] %s224
          %230 = dma.hbm_to_vmem [thread:$0]  %s223, 2048, %s225, %s214, 128, 128, 8
        $region36: #{tpu_custom_call.1} parent=27 // pred_fallthru
          _
      $region28: #{tpu_custom_call.1} parent=5 // pred_fallthru
        _
      %p231 = scmp.le.s32.totalorder 1, %s20
      %p232 = scmp.lt.s32.totalorder %s20, 3
      %p233 = pnand %p231, %p232
      %p234 = pneg %p233
      // Predicated region
      $region37: #{tpu_custom_call.1} parent=5 // pred_check
        _
      $region38: #{tpu_custom_call.1} parent=5 // pred_check_branch
        %236 = sbr.rel (%p233) target = $region40
      $region39: #{tpu_custom_call.1} parent=5 // pred_region
        %s237 = ssub.s32 %s20, 1
        %s238 = sand.u32 %s33, 1
        %s239 = scalar_lea.sflag [#allocation3], %s238
        %s240 = sand.u32 %s33, 1
        %s241 = smul.addr %s240, 128
        %s242 = scalar_lea.vmem [#allocation2], %s241
        // Predicated region
        $region41: #{tpu_custom_call.1} parent=39 // pred_check
          %p243 = pneg %p46
        $region42: #{tpu_custom_call.1} parent=39 // pred_check_branch
          %245 = sbr.rel (%p243) target = $region44
        $region43: #{tpu_custom_call.1} parent=39 // pred_region
          %246 = dma.done %s239, 2048
        $region44: #{tpu_custom_call.1} parent=39 // pred_fallthru
          _
        %s247 = sand.u32 %s59, 1
        %s248 = scalar_lea.sflag [#allocation6], %s247
        %s249 = sand.u32 %s59, 1
        %s250 = smul.addr %s249, 128
        %s251 = scalar_lea.vmem [#allocation5], %s250
        // Predicated region
        $region45: #{tpu_custom_call.1} parent=39 // pred_check
          %p252 = pneg %p72
        $region46: #{tpu_custom_call.1} parent=39 // pred_check_branch
          %254 = sbr.rel (%p252) target = $region48
        $region47: #{tpu_custom_call.1} parent=39 // pred_region
          %255 = dma.done %s248, 2048
        $region48: #{tpu_custom_call.1} parent=39 // pred_fallthru
          _
        %s256 = sand.u32 %s33, 1
        %s257 = scalar_lea.sflag [#allocation3], %s256
        %s258 = sand.u32 %s33, 1
        %s259 = smul.addr %s258, 128
        %s260 = scalar_lea.vmem [#allocation2], %s259
        %p261 = pneg %p46
        %p262 = pneg %p43
        %s263 = sand.u32 %s59, 1
        %s264 = scalar_lea.sflag [#allocation6], %s263
        %s265 = sand.u32 %s59, 1
        %s266 = smul.addr %s265, 128
        %s267 = scalar_lea.vmem [#allocation5], %s266
        %p268 = pneg %p72
        %p269 = pneg %p69
        %p270 = pneg %p93
        %p271 = pneg %p90
        %p272 = pneg %p114
        %p273 = pneg %p111
        %p274 = pneg %p135
        %p275 = pneg %p132
        %p276 = pneg %p161
        %p277 = pneg %p158
        %s278 = sand.u32 %s148, 1
        %s279 = scalar_lea.sflag [#allocation4], %s278
        %s280 = sand.u32 %s148, 1
        %s281 = scalar_lea.vmem [#allocation7], %s280
        %s282 = smul.u32 16, %s25
        %s283 = smul.u32 16, %s25
        %v285 = vld [vmem:[%s242] sm:$0xff]
        %v286 = vld [vmem:[%s242 + $0x8] sm:$0xff]
        %v287 = vld [vmem:[%s242 + $0x10] sm:$0xff]
        %v288 = vld [vmem:[%s242 + $0x18] sm:$0xff]
        %v289 = vld [vmem:[%s242 + $0x20] sm:$0xff]
        %v290 = vld [vmem:[%s242 + $0x28] sm:$0xff]
        %v291 = vld [vmem:[%s242 + $0x30] sm:$0xff]
        %v292 = vld [vmem:[%s242 + $0x38] sm:$0xff]
        %v293 = vld [vmem:[%s242 + $0x40] sm:$0xff]
        %v294 = vld [vmem:[%s242 + $0x48] sm:$0xff]
        %v295 = vld [vmem:[%s242 + $0x50] sm:$0xff]
        %v296 = vld [vmem:[%s242 + $0x58] sm:$0xff]
        %v297 = vld [vmem:[%s242 + $0x60] sm:$0xff]
        %v298 = vld [vmem:[%s242 + $0x68] sm:$0xff]
        %v299 = vld [vmem:[%s242 + $0x70] sm:$0xff]
        %v300 = vld [vmem:[%s242 + $0x78] sm:$0xff]
        %v301 = vld [vmem:[%s251] sm:$0xff]
        %v302 = vld [vmem:[%s251 + $0x8] sm:$0xff]
        %v303 = vld [vmem:[%s251 + $0x10] sm:$0xff]
        %v304 = vld [vmem:[%s251 + $0x18] sm:$0xff]
        %v305 = vld [vmem:[%s251 + $0x20] sm:$0xff]
        %v306 = vld [vmem:[%s251 + $0x28] sm:$0xff]
        %v307 = vld [vmem:[%s251 + $0x30] sm:$0xff]
        %v308 = vld [vmem:[%s251 + $0x38] sm:$0xff]
        %v309 = vld [vmem:[%s251 + $0x40] sm:$0xff]
        %v310 = vld [vmem:[%s251 + $0x48] sm:$0xff]
        %v311 = vld [vmem:[%s251 + $0x50] sm:$0xff]
        %v312 = vld [vmem:[%s251 + $0x58] sm:$0xff]
        %v313 = vld [vmem:[%s251 + $0x60] sm:$0xff]
        %v314 = vld [vmem:[%s251 + $0x68] sm:$0xff]
        %v315 = vld [vmem:[%s251 + $0x70] sm:$0xff]
        %v316 = vld [vmem:[%s251 + $0x78] sm:$0xff]
        %v317 = vld [vmem:[%s2] sm:$0xff]
        %v318 = vld [vmem:[%s2 + $0x8] sm:$0xff]
        %v319 = vld [vmem:[%s2 + $0x10] sm:$0xff]
        %v320 = vld [vmem:[%s2 + $0x18] sm:$0xff]
        %v321 = vld [vmem:[%s2 + $0x20] sm:$0xff]
        %v322 = vld [vmem:[%s2 + $0x28] sm:$0xff]
        %v323 = vld [vmem:[%s2 + $0x30] sm:$0xff]
        %v324 = vld [vmem:[%s2 + $0x38] sm:$0xff]
        %v325 = vld [vmem:[%s2 + $0x40] sm:$0xff]
        %v326 = vld [vmem:[%s2 + $0x48] sm:$0xff]
        %v327 = vld [vmem:[%s2 + $0x50] sm:$0xff]
        %v328 = vld [vmem:[%s2 + $0x58] sm:$0xff]
        %v329 = vld [vmem:[%s2 + $0x60] sm:$0xff]
        %v330 = vld [vmem:[%s2 + $0x68] sm:$0xff]
        %v331 = vld [vmem:[%s2 + $0x70] sm:$0xff]
        %v332 = vld [vmem:[%s2 + $0x78] sm:$0xff]
        %v333 = vld [vmem:[%s3] sm:$0xff]
        %v334 = vld [vmem:[%s4] sm:$0x1]
        %v335 = vpack.c.bf16 %v318, %v317
        %v336 = vpack.c.bf16 %v320, %v319
        %v337 = vpack.c.bf16 %v322, %v321
        %v338 = vpack.c.bf16 %v324, %v323
        %v339 = vpack.c.bf16 %v326, %v325
        %v340 = vpack.c.bf16 %v328, %v327
        %v341 = vpack.c.bf16 %v330, %v329
        %v342 = vpack.c.bf16 %v332, %v331
        %v343 = vpack.c.bf16 %v333, %v333
        %v344 = vpack.c.bf16 %v286, %v285
        %v345 = vpack.c.bf16 %v288, %v287
        %v346 = vpack.c.bf16 %v290, %v289
        %v347 = vpack.c.bf16 %v292, %v291
        %v348 = vpack.c.bf16 %v294, %v293
        %v349 = vpack.c.bf16 %v296, %v295
        %v350 = vpack.c.bf16 %v298, %v297
        %v351 = vpack.c.bf16 %v300, %v299
        %v353 = vlaneseq
        %v354 = vshrl.u32 %v353, 7
        %v355 = vsub.s32 0, %v354
        %v356 = vrot.slane %v334, %v355
        %358 = vmatprep.subr.bf16.mxu0 0
        %359 = vmatpush1.bf16.msra.mxu0 %v335
        %360 = vmatprep.subr.bf16.mxu0 0
        %361 = vmatpush1.bf16.msra.mxu0 %v336
        %362 = vmatprep.subr.bf16.mxu0 0
        %363 = vmatpush1.bf16.msra.mxu0 %v337
        %364 = vmatprep.subr.bf16.mxu0 0
        %365 = vmatpush1.bf16.msra.mxu0 %v338
        %366 = vmatprep.subr.bf16.mxu0 0
        %367 = vmatpush1.bf16.msra.mxu0 %v339
        %368 = vmatprep.subr.bf16.mxu0 0
        %369 = vmatpush1.bf16.msra.mxu0 %v340
        %370 = vmatprep.subr.bf16.mxu0 0
        %371 = vmatpush1.bf16.msra.mxu0 %v341
        %372 = vmatprep.subr.bf16.mxu0 0
        %373 = vmatpush1.bf16.msra.mxu0 %v342
        %374 = vmatprep.subr.bf16.mxu0 0
        %375 = vmatpush1.bf16.msra.mxu0 0
        %376 = vmatprep.subr.bf16.mxu0 0
        %377 = vmatpush1.bf16.msra.mxu0 0
        %378 = vmatprep.subr.bf16.mxu0 0
        %379 = vmatpush1.bf16.msra.mxu0 0
        %380 = vmatprep.subr.bf16.mxu0 0
        %381 = vmatpush1.bf16.msra.mxu0 0
        %382 = vmatprep.subr.bf16.mxu0 0
        %383 = vmatpush1.bf16.msra.mxu0 0
        %384 = vmatprep.subr.bf16.mxu0 0
        %385 = vmatpush1.bf16.msra.mxu0 0
        %386 = vmatprep.subr.bf16.mxu0 0
        %387 = vmatpush1.bf16.msra.mxu0 0
        %388 = vmatprep.subr.bf16.mxu0 0
        %389 = vmatpush1.bf16.msra.mxu0 0
        %390 = vmatprep.mubr.bf16.mxu0 0
        %391 = vmatmul.mubr.bf16.gmra.mrb[0].mxu0 %v344
        %v392 = vpop.f32.mrb[0].mxu0
        %v393 = vadd.f32 %v356, %v392
        %v394 = vpop.f32.mrb[0].mxu0
        %v395 = vpop.f32.mrb[0].mxu0
        %v396 = vadd.f32 %v356, %v395
        %v397 = vpop.f32.mrb[0].mxu0
        %398 = vmatprep.mubr.bf16.mxu0 0
        %399 = vmatmul.mubr.bf16.gmra.mrb[0].mxu0 %v345
        %v400 = vpop.f32.mrb[0].mxu0
        %v401 = vadd.f32 %v356, %v400
        %v402 = vpop.f32.mrb[0].mxu0
        %v403 = vpop.f32.mrb[0].mxu0
        %v404 = vadd.f32 %v356, %v403
        %v405 = vpop.f32.mrb[0].mxu0
        %406 = vmatprep.mubr.bf16.mxu0 0
        %407 = vmatmul.mubr.bf16.gmra.mrb[0].mxu0 %v346
        %v408 = vpop.f32.mrb[0].mxu0
        %v409 = vadd.f32 %v356, %v408
        %v410 = vpop.f32.mrb[0].mxu0
        %v411 = vpop.f32.mrb[0].mxu0
        %v412 = vadd.f32 %v356, %v411
        %v413 = vpop.f32.mrb[0].mxu0
        %414 = vmatprep.mubr.bf16.mxu0 0
        %415 = vmatmul.mubr.bf16.gmra.mrb[0].mxu0 %v347
        %v416 = vpop.f32.mrb[0].mxu0
        %v417 = vadd.f32 %v356, %v416
        %v418 = vpop.f32.mrb[0].mxu0
        %v419 = vpop.f32.mrb[0].mxu0
        %v420 = vadd.f32 %v356, %v419
        %v421 = vpop.f32.mrb[0].mxu0
        %422 = vmatprep.mubr.bf16.mxu0 0
        %423 = vmatmul.mubr.bf16.gmra.mrb[0].mxu0 %v348
        %v424 = vpop.f32.mrb[0].mxu0
        %v425 = vadd.f32 %v356, %v424
        %v426 = vpop.f32.mrb[0].mxu0
        %v427 = vpop.f32.mrb[0].mxu0
        %v428 = vadd.f32 %v356, %v427
        %v429 = vpop.f32.mrb[0].mxu0
        %430 = vmatprep.mubr.bf16.mxu0 0
        %431 = vmatmul.mubr.bf16.gmra.mrb[0].mxu0 %v349
        %v432 = vpop.f32.mrb[0].mxu0
        %v433 = vadd.f32 %v356, %v432
        %v434 = vpop.f32.mrb[0].mxu0
        %v435 = vpop.f32.mrb[0].mxu0
        %v436 = vadd.f32 %v356, %v435
        %v437 = vpop.f32.mrb[0].mxu0
        %438 = vmatprep.mubr.bf16.mxu0 0
        %439 = vmatmul.mubr.bf16.gmra.mrb[0].mxu0 %v350
        %v440 = vpop.f32.mrb[0].mxu0
        %v441 = vadd.f32 %v356, %v440
        %v442 = vpop.f32.mrb[0].mxu0
        %v443 = vpop.f32.mrb[0].mxu0
        %v444 = vadd.f32 %v356, %v443
        %v445 = vpop.f32.mrb[0].mxu0
        %446 = vmatprep.mubr.bf16.mxu0 0
        %447 = vmatmul.mubr.bf16.gmra.mrb[0].mxu0 %v351
        %v448 = vpop.f32.mrb[0].mxu0
        %v449 = vadd.f32 %v356, %v448
        %v450 = vpop.f32.mrb[0].mxu0
        %v451 = vpop.f32.mrb[0].mxu0
        %v452 = vadd.f32 %v356, %v451
        %v453 = vpop.f32.mrb[0].mxu0
        %454 = vdwg.mxu0
        %vm455 = vcmask 64512
        %v456 = vsel %vm455, %v393, -inf
        %457 = vmax.xlane.f32.xlu0 %v456
        %v458 = vpop.xlane.xlu0 %457
        %v459 = vsel %vm455, %v396, -inf
        %460 = vmax.xlane.f32.xlu0 %v459
        %v461 = vpop.xlane.xlu0 %460
        %v462 = vsel %vm455, %v401, -inf
        %463 = vmax.xlane.f32.xlu0 %v462
        %v464 = vpop.xlane.xlu0 %463
        %v465 = vsel %vm455, %v404, -inf
        %466 = vmax.xlane.f32.xlu0 %v465
        %v467 = vpop.xlane.xlu0 %466
        %v468 = vsel %vm455, %v409, -inf
        %469 = vmax.xlane.f32.xlu0 %v468
        %v470 = vpop.xlane.xlu0 %469
        %v471 = vsel %vm455, %v412, -inf
        %472 = vmax.xlane.f32.xlu0 %v471
        %v473 = vpop.xlane.xlu0 %472
        %v474 = vsel %vm455, %v417, -inf
        %475 = vmax.xlane.f32.xlu0 %v474
        %v476 = vpop.xlane.xlu0 %475
        %v477 = vsel %vm455, %v420, -inf
        %478 = vmax.xlane.f32.xlu0 %v477
        %v479 = vpop.xlane.xlu0 %478
        %v480 = vsel %vm455, %v425, -inf
        %481 = vmax.xlane.f32.xlu0 %v480
        %v482 = vpop.xlane.xlu0 %481
        %v483 = vsel %vm455, %v428, -inf
        %484 = vmax.xlane.f32.xlu0 %v483
        %v485 = vpop.xlane.xlu0 %484
        %v486 = vsel %vm455, %v433, -inf
        %487 = vmax.xlane.f32.xlu0 %v486
        %v488 = vpop.xlane.xlu0 %487
        %v489 = vsel %vm455, %v436, -inf
        %490 = vmax.xlane.f32.xlu0 %v489
        %v491 = vpop.xlane.xlu0 %490
        %v492 = vsel %vm455, %v441, -inf
        %493 = vmax.xlane.f32.xlu0 %v492
        %v494 = vpop.xlane.xlu0 %493
        %v495 = vsel %vm455, %v444, -inf
        %496 = vmax.xlane.f32.xlu0 %v495
        %v497 = vpop.xlane.xlu0 %496
        %v498 = vsel %vm455, %v449, -inf
        %499 = vmax.xlane.f32.xlu0 %v498
        %v500 = vpop.xlane.xlu0 %499
        %v501 = vsel %vm455, %v452, -inf
        %502 = vmax.xlane.f32.xlu0 %v501
        %v503 = vpop.xlane.xlu0 %502
        %v504 = vsub.f32 %v393, %v458
        %v505 = vsub.f32 %v396, %v461
        %v506 = vsub.f32 %v401, %v464
        %v507 = vsub.f32 %v404, %v467
        %v508 = vsub.f32 %v409, %v470
        %v509 = vsub.f32 %v412, %v473
        %v510 = vsub.f32 %v417, %v476
        %v511 = vsub.f32 %v420, %v479
        %v512 = vsub.f32 %v425, %v482
        %v513 = vsub.f32 %v428, %v485
        %v514 = vsub.f32 %v433, %v488
        %v515 = vsub.f32 %v436, %v491
        %v516 = vsub.f32 %v441, %v494
        %v517 = vsub.f32 %v444, %v497
        %v518 = vsub.f32 %v449, %v500
        %v519 = vsub.f32 %v452, %v503
        %v520 = vmul.f32 %v504, 1.442695
        %v521 = vpow.pop %v520
        %v522 = vmul.f32 %v505, 1.442695
        %v523 = vpow.pop %v522
        %v524 = vmul.f32 %v506, 1.442695
        %v525 = vpow.pop %v524
        %v526 = vmul.f32 %v507, 1.442695
        %v527 = vpow.pop %v526
        %v528 = vmul.f32 %v508, 1.442695
        %v529 = vpow.pop %v528
        %v530 = vmul.f32 %v509, 1.442695
        %v531 = vpow.pop %v530
        %v532 = vmul.f32 %v510, 1.442695
        %v533 = vpow.pop %v532
        %v534 = vmul.f32 %v511, 1.442695
        %v535 = vpow.pop %v534
        %v536 = vmul.f32 %v512, 1.442695
        %v537 = vpow.pop %v536
        %v538 = vmul.f32 %v513, 1.442695
        %v539 = vpow.pop %v538
        %v540 = vmul.f32 %v514, 1.442695
        %v541 = vpow.pop %v540
        %v542 = vmul.f32 %v515, 1.442695
        %v543 = vpow.pop %v542
        %v544 = vmul.f32 %v516, 1.442695
        %v545 = vpow.pop %v544
        %v546 = vmul.f32 %v517, 1.442695
        %v547 = vpow.pop %v546
        %v548 = vmul.f32 %v518, 1.442695
        %v549 = vpow.pop %v548
        %v550 = vmul.f32 %v519, 1.442695
        %v551 = vpow.pop %v550
        %v552 = vsel %vm455, %v521, 0.0
        %553 = vadd.xlane.f32.xlu0 %v552
        %v554 = vpop.xlane.xlu0 %553
        %v555 = vsel %vm455, %v523, 0.0
        %556 = vadd.xlane.f32.xlu0 %v555
        %v557 = vpop.xlane.xlu0 %556
        %v558 = vsel %vm455, %v525, 0.0
        %559 = vadd.xlane.f32.xlu0 %v558
        %v560 = vpop.xlane.xlu0 %559
        %v561 = vsel %vm455, %v527, 0.0
        %562 = vadd.xlane.f32.xlu0 %v561
        %v563 = vpop.xlane.xlu0 %562
        %v564 = vsel %vm455, %v529, 0.0
        %565 = vadd.xlane.f32.xlu0 %v564
        %v566 = vpop.xlane.xlu0 %565
        %v567 = vsel %vm455, %v531, 0.0
        %568 = vadd.xlane.f32.xlu0 %v567
        %v569 = vpop.xlane.xlu0 %568
        %v570 = vsel %vm455, %v533, 0.0
        %571 = vadd.xlane.f32.xlu0 %v570
        %v572 = vpop.xlane.xlu0 %571
        %v573 = vsel %vm455, %v535, 0.0
        %574 = vadd.xlane.f32.xlu0 %v573
        %v575 = vpop.xlane.xlu0 %574
        %v576 = vsel %vm455, %v537, 0.0
        %577 = vadd.xlane.f32.xlu0 %v576
        %v578 = vpop.xlane.xlu0 %577
        %v579 = vsel %vm455, %v539, 0.0
        %580 = vadd.xlane.f32.xlu0 %v579
        %v581 = vpop.xlane.xlu0 %580
        %v582 = vsel %vm455, %v541, 0.0
        %583 = vadd.xlane.f32.xlu0 %v582
        %v584 = vpop.xlane.xlu0 %583
        %v585 = vsel %vm455, %v543, 0.0
        %586 = vadd.xlane.f32.xlu0 %v585
        %v587 = vpop.xlane.xlu0 %586
        %v588 = vsel %vm455, %v545, 0.0
        %589 = vadd.xlane.f32.xlu0 %v588
        %v590 = vpop.xlane.xlu0 %589
        %v591 = vsel %vm455, %v547, 0.0
        %592 = vadd.xlane.f32.xlu0 %v591
        %v593 = vpop.xlane.xlu0 %592
        %v594 = vsel %vm455, %v549, 0.0
        %595 = vadd.xlane.f32.xlu0 %v594
        %v596 = vpop.xlane.xlu0 %595
        %v597 = vsel %vm455, %v551, 0.0
        %598 = vadd.xlane.f32.xlu0 %v597
        %v599 = vpop.xlane.xlu0 %598
        %v600 = vrcp.pop %v554
        %v601 = vrcp.pop %v557
        %v602 = vrcp.pop %v560
        %v603 = vrcp.pop %v563
        %v604 = vrcp.pop %v566
        %v605 = vrcp.pop %v569
        %v606 = vrcp.pop %v572
        %v607 = vrcp.pop %v575
        %v608 = vrcp.pop %v578
        %v609 = vrcp.pop %v581
        %v610 = vrcp.pop %v584
        %v611 = vrcp.pop %v587
        %v612 = vrcp.pop %v590
        %v613 = vrcp.pop %v593
        %v614 = vrcp.pop %v596
        %v615 = vrcp.pop %v599
        %v616 = vmul.f32 %v521, %v600
        %v617 = vmul.f32 %v523, %v601
        %v618 = vmul.f32 %v525, %v602
        %v619 = vmul.f32 %v527, %v603
        %v620 = vmul.f32 %v529, %v604
        %v621 = vmul.f32 %v531, %v605
        %v622 = vmul.f32 %v533, %v606
        %v623 = vmul.f32 %v535, %v607
        %v624 = vmul.f32 %v537, %v608
        %v625 = vmul.f32 %v539, %v609
        %v626 = vmul.f32 %v541, %v610
        %v627 = vmul.f32 %v543, %v611
        %v628 = vmul.f32 %v545, %v612
        %v629 = vmul.f32 %v547, %v613
        %v630 = vmul.f32 %v549, %v614
        %v631 = vmul.f32 %v551, %v615
        %v632 = vlog2.pop %v554
        %v633 = vmul.f32 %v632, 0.6931472
        %v634 = vlog2.pop %v557
        %v635 = vmul.f32 %v634, 0.6931472
        %v636 = vlog2.pop %v560
        %v637 = vmul.f32 %v636, 0.6931472
        %v638 = vlog2.pop %v563
        %v639 = vmul.f32 %v638, 0.6931472
        %v640 = vlog2.pop %v566
        %v641 = vmul.f32 %v640, 0.6931472
        %v642 = vlog2.pop %v569
        %v643 = vmul.f32 %v642, 0.6931472
        %v644 = vlog2.pop %v572
        %v645 = vmul.f32 %v644, 0.6931472
        %v646 = vlog2.pop %v575
        %v647 = vmul.f32 %v646, 0.6931472
        %v648 = vlog2.pop %v578
        %v649 = vmul.f32 %v648, 0.6931472
        %v650 = vlog2.pop %v581
        %v651 = vmul.f32 %v650, 0.6931472
        %v652 = vlog2.pop %v584
        %v653 = vmul.f32 %v652, 0.6931472
        %v654 = vlog2.pop %v587
        %v655 = vmul.f32 %v654, 0.6931472
        %v656 = vlog2.pop %v590
        %v657 = vmul.f32 %v656, 0.6931472
        %v658 = vlog2.pop %v593
        %v659 = vmul.f32 %v658, 0.6931472
        %v660 = vlog2.pop %v596
        %v661 = vmul.f32 %v660, 0.6931472
        %v662 = vlog2.pop %v599
        %v663 = vmul.f32 %v662, 0.6931472
        %v664 = vsub.f32 %v504, %v633
        %v665 = vsub.f32 %v505, %v635
        %v666 = vsub.f32 %v506, %v637
        %v667 = vsub.f32 %v507, %v639
        %v668 = vsub.f32 %v508, %v641
        %v669 = vsub.f32 %v509, %v643
        %v670 = vsub.f32 %v510, %v645
        %v671 = vsub.f32 %v511, %v647
        %v672 = vsub.f32 %v512, %v649
        %v673 = vsub.f32 %v513, %v651
        %v674 = vsub.f32 %v514, %v653
        %v675 = vsub.f32 %v515, %v655
        %v676 = vsub.f32 %v516, %v657
        %v677 = vsub.f32 %v517, %v659
        %v678 = vsub.f32 %v518, %v661
        %v679 = vsub.f32 %v519, %v663
        %v680 = vpack.c.bf16 %v302, %v301
        %v681 = vpack.c.bf16 %v304, %v303
        %v682 = vpack.c.bf16 %v306, %v305
        %v683 = vpack.c.bf16 %v308, %v307
        %v684 = vpack.c.bf16 %v310, %v309
        %v685 = vpack.c.bf16 %v312, %v311
        %v686 = vpack.c.bf16 %v314, %v313
        %v687 = vpack.c.bf16 %v316, %v315
        %688 = vmatprep.subr.bf16.mxu0 0
        %689 = vmatpush1.bf16.msra.mxu0 %v335
        %690 = vmatprep.subr.bf16.mxu0 0
        %691 = vmatpush1.bf16.msra.mxu0 %v336
        %692 = vmatprep.subr.bf16.mxu0 0
        %693 = vmatpush1.bf16.msra.mxu0 %v337
        %694 = vmatprep.subr.bf16.mxu0 0
        %695 = vmatpush1.bf16.msra.mxu0 %v338
        %696 = vmatprep.subr.bf16.mxu0 0
        %697 = vmatpush1.bf16.msra.mxu0 %v339
        %698 = vmatprep.subr.bf16.mxu0 0
        %699 = vmatpush1.bf16.msra.mxu0 %v340
        %700 = vmatprep.subr.bf16.mxu0 0
        %701 = vmatpush1.bf16.msra.mxu0 %v341
        %702 = vmatprep.subr.bf16.mxu0 0
        %703 = vmatpush1.bf16.msra.mxu0 %v342
        %704 = vmatprep.subr.bf16.mxu0 0
        %705 = vmatpush1.bf16.msra.mxu0 0
        %706 = vmatprep.subr.bf16.mxu0 0
        %707 = vmatpush1.bf16.msra.mxu0 0
        %708 = vmatprep.subr.bf16.mxu0 0
        %709 = vmatpush1.bf16.msra.mxu0 0
        %710 = vmatprep.subr.bf16.mxu0 0
        %711 = vmatpush1.bf16.msra.mxu0 0
        %712 = vmatprep.subr.bf16.mxu0 0
        %713 = vmatpush1.bf16.msra.mxu0 0
        %714 = vmatprep.subr.bf16.mxu0 0
        %715 = vmatpush1.bf16.msra.mxu0 0
        %716 = vmatprep.subr.bf16.mxu0 0
        %717 = vmatpush1.bf16.msra.mxu0 0
        %718 = vmatprep.subr.bf16.mxu0 0
        %719 = vmatpush1.bf16.msra.mxu0 0
        %720 = vmatprep.mubr.bf16.mxu0 0
        %721 = vmatmul.mubr.bf16.gmra.mrb[0].mxu0 %v680
        %v722 = vpop.f32.mrb[0].mxu0
        %v723 = vadd.f32 0.0, %v722
        %v724 = vpop.f32.mrb[0].mxu0
        %v725 = vpop.f32.mrb[0].mxu0
        %v726 = vadd.f32 0.0, %v725
        %v727 = vpop.f32.mrb[0].mxu0
        %728 = vmatprep.mubr.bf16.mxu0 0
        %729 = vmatmul.mubr.bf16.gmra.mrb[0].mxu0 %v681
        %v730 = vpop.f32.mrb[0].mxu0
        %v731 = vadd.f32 0.0, %v730
        %v732 = vpop.f32.mrb[0].mxu0
        %v733 = vpop.f32.mrb[0].mxu0
        %v734 = vadd.f32 0.0, %v733
        %v735 = vpop.f32.mrb[0].mxu0
        %736 = vmatprep.mubr.bf16.mxu0 0
        %737 = vmatmul.mubr.bf16.gmra.mrb[0].mxu0 %v682
        %v738 = vpop.f32.mrb[0].mxu0
        %v739 = vadd.f32 0.0, %v738
        %v740 = vpop.f32.mrb[0].mxu0
        %v741 = vpop.f32.mrb[0].mxu0
        %v742 = vadd.f32 0.0, %v741
        %v743 = vpop.f32.mrb[0].mxu0
        %744 = vmatprep.mubr.bf16.mxu0 0
        %745 = vmatmul.mubr.bf16.gmra.mrb[0].mxu0 %v683
        %v746 = vpop.f32.mrb[0].mxu0
        %v747 = vadd.f32 0.0, %v746
        %v748 = vpop.f32.mrb[0].mxu0
        %v749 = vpop.f32.mrb[0].mxu0
        %v750 = vadd.f32 0.0, %v749
        %v751 = vpop.f32.mrb[0].mxu0
        %752 = vmatprep.mubr.bf16.mxu0 0
        %753 = vmatmul.mubr.bf16.gmra.mrb[0].mxu0 %v684
        %v754 = vpop.f32.mrb[0].mxu0
        %v755 = vadd.f32 0.0, %v754
        %v756 = vpop.f32.mrb[0].mxu0
        %v757 = vpop.f32.mrb[0].mxu0
        %v758 = vadd.f32 0.0, %v757
        %v759 = vpop.f32.mrb[0].mxu0
        %760 = vmatprep.mubr.bf16.mxu0 0
        %761 = vmatmul.mubr.bf16.gmra.mrb[0].mxu0 %v685
        %v762 = vpop.f32.mrb[0].mxu0
        %v763 = vadd.f32 0.0, %v762
        %v764 = vpop.f32.mrb[0].mxu0
        %v765 = vpop.f32.mrb[0].mxu0
        %v766 = vadd.f32 0.0, %v765
        %v767 = vpop.f32.mrb[0].mxu0
        %768 = vmatprep.mubr.bf16.mxu0 0
        %769 = vmatmul.mubr.bf16.gmra.mrb[0].mxu0 %v686
        %v770 = vpop.f32.mrb[0].mxu0
        %v771 = vadd.f32 0.0, %v770
        %v772 = vpop.f32.mrb[0].mxu0
        %v773 = vpop.f32.mrb[0].mxu0
        %v774 = vadd.f32 0.0, %v773
        %v775 = vpop.f32.mrb[0].mxu0
        %776 = vmatprep.mubr.bf16.mxu0 0
        %777 = vmatmul.mubr.bf16.gmra.mrb[0].mxu0 %v687
        %v778 = vpop.f32.mrb[0].mxu0
        %v779 = vadd.f32 0.0, %v778
        %v780 = vpop.f32.mrb[0].mxu0
        %v781 = vpop.f32.mrb[0].mxu0
        %v782 = vadd.f32 0.0, %v781
        %v783 = vpop.f32.mrb[0].mxu0
        %784 = vdwg.mxu0
        %v785 = vadd.f32 %v393, %v723
        %v786 = vadd.f32 %v396, %v726
        %v787 = vadd.f32 %v401, %v731
        %v788 = vadd.f32 %v404, %v734
        %v789 = vadd.f32 %v409, %v739
        %v790 = vadd.f32 %v412, %v742
        %v791 = vadd.f32 %v417, %v747
        %v792 = vadd.f32 %v420, %v750
        %v793 = vadd.f32 %v425, %v755
        %v794 = vadd.f32 %v428, %v758
        %v795 = vadd.f32 %v433, %v763
        %v796 = vadd.f32 %v436, %v766
        %v797 = vadd.f32 %v441, %v771
        %v798 = vadd.f32 %v444, %v774
        %v799 = vadd.f32 %v449, %v779
        %v800 = vadd.f32 %v452, %v782
        %v801 = vsel %vm455, %v785, -inf
        %802 = vmax.xlane.f32.xlu0 %v801
        %v803 = vpop.xlane.xlu0 %802
        %v804 = vsel %vm455, %v786, -inf
        %805 = vmax.xlane.f32.xlu0 %v804
        %v806 = vpop.xlane.xlu0 %805
        %v807 = vsel %vm455, %v787, -inf
        %808 = vmax.xlane.f32.xlu0 %v807
        %v809 = vpop.xlane.xlu0 %808
        %v810 = vsel %vm455, %v788, -inf
        %811 = vmax.xlane.f32.xlu0 %v810
        %v812 = vpop.xlane.xlu0 %811
        %v813 = vsel %vm455, %v789, -inf
        %814 = vmax.xlane.f32.xlu0 %v813
        %v815 = vpop.xlane.xlu0 %814
        %v816 = vsel %vm455, %v790, -inf
        %817 = vmax.xlane.f32.xlu0 %v816
        %v818 = vpop.xlane.xlu0 %817
        %v819 = vsel %vm455, %v791, -inf
        %820 = vmax.xlane.f32.xlu0 %v819
        %v821 = vpop.xlane.xlu0 %820
        %v822 = vsel %vm455, %v792, -inf
        %823 = vmax.xlane.f32.xlu0 %v822
        %v824 = vpop.xlane.xlu0 %823
        %v825 = vsel %vm455, %v793, -inf
        %826 = vmax.xlane.f32.xlu0 %v825
        %v827 = vpop.xlane.xlu0 %826
        %v828 = vsel %vm455, %v794, -inf
        %829 = vmax.xlane.f32.xlu0 %v828
        %v830 = vpop.xlane.xlu0 %829
        %v831 = vsel %vm455, %v795, -inf
        %832 = vmax.xlane.f32.xlu0 %v831
        %v833 = vpop.xlane.xlu0 %832
        %v834 = vsel %vm455, %v796, -inf
        %835 = vmax.xlane.f32.xlu0 %v834
        %v836 = vpop.xlane.xlu0 %835
        %v837 = vsel %vm455, %v797, -inf
        %838 = vmax.xlane.f32.xlu0 %v837
        %v839 = vpop.xlane.xlu0 %838
        %v840 = vsel %vm455, %v798, -inf
        %841 = vmax.xlane.f32.xlu0 %v840
        %v842 = vpop.xlane.xlu0 %841
        %v843 = vsel %vm455, %v799, -inf
        %844 = vmax.xlane.f32.xlu0 %v843
        %v845 = vpop.xlane.xlu0 %844
        %v846 = vsel %vm455, %v800, -inf
        %847 = vmax.xlane.f32.xlu0 %v846
        %v848 = vpop.xlane.xlu0 %847
        %v849 = vsub.f32 %v785, %v803
        %v850 = vsub.f32 %v786, %v806
        %v851 = vsub.f32 %v787, %v809
        %v852 = vsub.f32 %v788, %v812
        %v853 = vsub.f32 %v789, %v815
        %v854 = vsub.f32 %v790, %v818
        %v855 = vsub.f32 %v791, %v821
        %v856 = vsub.f32 %v792, %v824
        %v857 = vsub.f32 %v793, %v827
        %v858 = vsub.f32 %v794, %v830
        %v859 = vsub.f32 %v795, %v833
        %v860 = vsub.f32 %v796, %v836
        %v861 = vsub.f32 %v797, %v839
        %v862 = vsub.f32 %v798, %v842
        %v863 = vsub.f32 %v799, %v845
        %v864 = vsub.f32 %v800, %v848
        %v865 = vmul.f32 %v849, 1.442695
        %v866 = vpow.pop %v865
        %v867 = vmul.f32 %v850, 1.442695
        %v868 = vpow.pop %v867
        %v869 = vmul.f32 %v851, 1.442695
        %v870 = vpow.pop %v869
        %v871 = vmul.f32 %v852, 1.442695
        %v872 = vpow.pop %v871
        %v873 = vmul.f32 %v853, 1.442695
        %v874 = vpow.pop %v873
        %v875 = vmul.f32 %v854, 1.442695
        %v876 = vpow.pop %v875
        %v877 = vmul.f32 %v855, 1.442695
        %v878 = vpow.pop %v877
        %v879 = vmul.f32 %v856, 1.442695
        %v880 = vpow.pop %v879
        %v881 = vmul.f32 %v857, 1.442695
        %v882 = vpow.pop %v881
        %v883 = vmul.f32 %v858, 1.442695
        %v884 = vpow.pop %v883
        %v885 = vmul.f32 %v859, 1.442695
        %v886 = vpow.pop %v885
        %v887 = vmul.f32 %v860, 1.442695
        %v888 = vpow.pop %v887
        %v889 = vmul.f32 %v861, 1.442695
        %v890 = vpow.pop %v889
        %v891 = vmul.f32 %v862, 1.442695
        %v892 = vpow.pop %v891
        %v893 = vmul.f32 %v863, 1.442695
        %v894 = vpow.pop %v893
        %v895 = vmul.f32 %v864, 1.442695
        %v896 = vpow.pop %v895
        %v897 = vsel %vm455, %v866, 0.0
        %898 = vadd.xlane.f32.xlu0 %v897
        %v899 = vpop.xlane.xlu0 %898
        %v900 = vsel %vm455, %v868, 0.0
        %901 = vadd.xlane.f32.xlu0 %v900
        %v902 = vpop.xlane.xlu0 %901
        %v903 = vsel %vm455, %v870, 0.0
        %904 = vadd.xlane.f32.xlu0 %v903
        %v905 = vpop.xlane.xlu0 %904
        %v906 = vsel %vm455, %v872, 0.0
        %907 = vadd.xlane.f32.xlu0 %v906
        %v908 = vpop.xlane.xlu0 %907
        %v909 = vsel %vm455, %v874, 0.0
        %910 = vadd.xlane.f32.xlu0 %v909
        %v911 = vpop.xlane.xlu0 %910
        %v912 = vsel %vm455, %v876, 0.0
        %913 = vadd.xlane.f32.xlu0 %v912
        %v914 = vpop.xlane.xlu0 %913
        %v915 = vsel %vm455, %v878, 0.0
        %916 = vadd.xlane.f32.xlu0 %v915
        %v917 = vpop.xlane.xlu0 %916
        %v918 = vsel %vm455, %v880, 0.0
        %919 = vadd.xlane.f32.xlu0 %v918
        %v920 = vpop.xlane.xlu0 %919
        %v921 = vsel %vm455, %v882, 0.0
        %922 = vadd.xlane.f32.xlu0 %v921
        %v923 = vpop.xlane.xlu0 %922
        %v924 = vsel %vm455, %v884, 0.0
        %925 = vadd.xlane.f32.xlu0 %v924
        %v926 = vpop.xlane.xlu0 %925
        %v927 = vsel %vm455, %v886, 0.0
        %928 = vadd.xlane.f32.xlu0 %v927
        %v929 = vpop.xlane.xlu0 %928
        %v930 = vsel %vm455, %v888, 0.0
        %931 = vadd.xlane.f32.xlu0 %v930
        %v932 = vpop.xlane.xlu0 %931
        %v933 = vsel %vm455, %v890, 0.0
        %934 = vadd.xlane.f32.xlu0 %v933
        %v935 = vpop.xlane.xlu0 %934
        %v936 = vsel %vm455, %v892, 0.0
        %937 = vadd.xlane.f32.xlu0 %v936
        %v938 = vpop.xlane.xlu0 %937
        %v939 = vsel %vm455, %v894, 0.0
        %940 = vadd.xlane.f32.xlu0 %v939
        %v941 = vpop.xlane.xlu0 %940
        %v942 = vsel %vm455, %v896, 0.0
        %943 = vadd.xlane.f32.xlu0 %v942
        %v944 = vpop.xlane.xlu0 %943
        %v945 = vrcp.pop %v899
        %v946 = vrcp.pop %v902
        %v947 = vrcp.pop %v905
        %v948 = vrcp.pop %v908
        %v949 = vrcp.pop %v911
        %v950 = vrcp.pop %v914
        %v951 = vrcp.pop %v917
        %v952 = vrcp.pop %v920
        %v953 = vrcp.pop %v923
        %v954 = vrcp.pop %v926
        %v955 = vrcp.pop %v929
        %v956 = vrcp.pop %v932
        %v957 = vrcp.pop %v935
        %v958 = vrcp.pop %v938
        %v959 = vrcp.pop %v941
        %v960 = vrcp.pop %v944
        %v961 = vmul.f32 %v866, %v945
        %v962 = vmul.f32 %v868, %v946
        %v963 = vmul.f32 %v870, %v947
        %v964 = vmul.f32 %v872, %v948
        %v965 = vmul.f32 %v874, %v949
        %v966 = vmul.f32 %v876, %v950
        %v967 = vmul.f32 %v878, %v951
        %v968 = vmul.f32 %v880, %v952
        %v969 = vmul.f32 %v882, %v953
        %v970 = vmul.f32 %v884, %v954
        %v971 = vmul.f32 %v886, %v955
        %v972 = vmul.f32 %v888, %v956
        %v973 = vmul.f32 %v890, %v957
        %v974 = vmul.f32 %v892, %v958
        %v975 = vmul.f32 %v894, %v959
        %v976 = vmul.f32 %v896, %v960
        %v977 = vlog2.pop %v899
        %v978 = vmul.f32 %v977, 0.6931472
        %v979 = vlog2.pop %v902
        %v980 = vmul.f32 %v979, 0.6931472
        %v981 = vlog2.pop %v905
        %v982 = vmul.f32 %v981, 0.6931472
        %v983 = vlog2.pop %v908
        %v984 = vmul.f32 %v983, 0.6931472
        %v985 = vlog2.pop %v911
        %v986 = vmul.f32 %v985, 0.6931472
        %v987 = vlog2.pop %v914
        %v988 = vmul.f32 %v987, 0.6931472
        %v989 = vlog2.pop %v917
        %v990 = vmul.f32 %v989, 0.6931472
        %v991 = vlog2.pop %v920
        %v992 = vmul.f32 %v991, 0.6931472
        %v993 = vlog2.pop %v923
        %v994 = vmul.f32 %v993, 0.6931472
        %v995 = vlog2.pop %v926
        %v996 = vmul.f32 %v995, 0.6931472
        %v997 = vlog2.pop %v929
        %v998 = vmul.f32 %v997, 0.6931472
        %v999 = vlog2.pop %v932
        %v1000 = vmul.f32 %v999, 0.6931472
        %v1001 = vlog2.pop %v935
        %v1002 = vmul.f32 %v1001, 0.6931472
        %v1003 = vlog2.pop %v938
        %v1004 = vmul.f32 %v1003, 0.6931472
        %v1005 = vlog2.pop %v941
        %v1006 = vmul.f32 %v1005, 0.6931472
        %v1007 = vlog2.pop %v944
        %v1008 = vmul.f32 %v1007, 0.6931472
        %v1009 = vsub.f32 %v849, %v978
        %v1010 = vsub.f32 %v850, %v980
        %v1011 = vsub.f32 %v851, %v982
        %v1012 = vsub.f32 %v852, %v984
        %v1013 = vsub.f32 %v853, %v986
        %v1014 = vsub.f32 %v854, %v988
        %v1015 = vsub.f32 %v855, %v990
        %v1016 = vsub.f32 %v856, %v992
        %v1017 = vsub.f32 %v857, %v994
        %v1018 = vsub.f32 %v858, %v996
        %v1019 = vsub.f32 %v859, %v998
        %v1020 = vsub.f32 %v860, %v1000
        %v1021 = vsub.f32 %v861, %v1002
        %v1022 = vsub.f32 %v862, %v1004
        %v1023 = vsub.f32 %v863, %v1006
        %v1024 = vsub.f32 %v864, %v1008
        %v1025 = vsub.f32 %v1009, %v664
        %v1026 = vsub.f32 %v1010, %v665
        %v1027 = vsub.f32 %v1011, %v666
        %v1028 = vsub.f32 %v1012, %v667
        %v1029 = vsub.f32 %v1013, %v668
        %v1030 = vsub.f32 %v1014, %v669
        %v1031 = vsub.f32 %v1015, %v670
        %v1032 = vsub.f32 %v1016, %v671
        %v1033 = vsub.f32 %v1017, %v672
        %v1034 = vsub.f32 %v1018, %v673
        %v1035 = vsub.f32 %v1019, %v674
        %v1036 = vsub.f32 %v1020, %v675
        %v1037 = vsub.f32 %v1021, %v676
        %v1038 = vsub.f32 %v1022, %v677
        %v1039 = vsub.f32 %v1023, %v678
        %v1040 = vsub.f32 %v1024, %v679
        %v1041 = vmul.f32 %v961, %v1025
        %v1042 = vmul.f32 %v962, %v1026
        %v1043 = vmul.f32 %v963, %v1027
        %v1044 = vmul.f32 %v964, %v1028
        %v1045 = vmul.f32 %v965, %v1029
        %v1046 = vmul.f32 %v966, %v1030
        %v1047 = vmul.f32 %v967, %v1031
        %v1048 = vmul.f32 %v968, %v1032
        %v1049 = vmul.f32 %v969, %v1033
        %v1050 = vmul.f32 %v970, %v1034
        %v1051 = vmul.f32 %v971, %v1035
        %v1052 = vmul.f32 %v972, %v1036
        %v1053 = vmul.f32 %v973, %v1037
        %v1054 = vmul.f32 %v974, %v1038
        %v1055 = vmul.f32 %v975, %v1039
        %v1056 = vmul.f32 %v976, %v1040
        %v1057 = vsel %vm455, %v1041, 0.0
        %1058 = vadd.xlane.f32.xlu0 %v1057
        %v1059 = vpop.xlane.xlu0 %1058
        %v1060 = vsel %vm455, %v1042, 0.0
        %1061 = vadd.xlane.f32.xlu0 %v1060
        %v1062 = vpop.xlane.xlu0 %1061
        %v1063 = vsel %vm455, %v1043, 0.0
        %1064 = vadd.xlane.f32.xlu0 %v1063
        %v1065 = vpop.xlane.xlu0 %1064
        %v1066 = vsel %vm455, %v1044, 0.0
        %1067 = vadd.xlane.f32.xlu0 %v1066
        %v1068 = vpop.xlane.xlu0 %1067
        %v1069 = vsel %vm455, %v1045, 0.0
        %1070 = vadd.xlane.f32.xlu0 %v1069
        %v1071 = vpop.xlane.xlu0 %1070
        %v1072 = vsel %vm455, %v1046, 0.0
        %1073 = vadd.xlane.f32.xlu0 %v1072
        %v1074 = vpop.xlane.xlu0 %1073
        %v1075 = vsel %vm455, %v1047, 0.0
        %1076 = vadd.xlane.f32.xlu0 %v1075
        %v1077 = vpop.xlane.xlu0 %1076
        %v1078 = vsel %vm455, %v1048, 0.0
        %1079 = vadd.xlane.f32.xlu0 %v1078
        %v1080 = vpop.xlane.xlu0 %1079
        %v1081 = vsel %vm455, %v1049, 0.0
        %1082 = vadd.xlane.f32.xlu0 %v1081
        %v1083 = vpop.xlane.xlu0 %1082
        %v1084 = vsel %vm455, %v1050, 0.0
        %1085 = vadd.xlane.f32.xlu0 %v1084
        %v1086 = vpop.xlane.xlu0 %1085
        %v1087 = vsel %vm455, %v1051, 0.0
        %1088 = vadd.xlane.f32.xlu0 %v1087
        %v1089 = vpop.xlane.xlu0 %1088
        %v1090 = vsel %vm455, %v1052, 0.0
        %1091 = vadd.xlane.f32.xlu0 %v1090
        %v1092 = vpop.xlane.xlu0 %1091
        %v1093 = vsel %vm455, %v1053, 0.0
        %1094 = vadd.xlane.f32.xlu0 %v1093
        %v1095 = vpop.xlane.xlu0 %1094
        %v1096 = vsel %vm455, %v1054, 0.0
        %1097 = vadd.xlane.f32.xlu0 %v1096
        %v1098 = vpop.xlane.xlu0 %1097
        %v1099 = vsel %vm455, %v1055, 0.0
        %1100 = vadd.xlane.f32.xlu0 %v1099
        %v1101 = vpop.xlane.xlu0 %1100
        %v1102 = vsel %vm455, %v1056, 0.0
        %1103 = vadd.xlane.f32.xlu0 %v1102
        %v1104 = vpop.xlane.xlu0 %1103
        %v1105 = vsub.f32 %v961, %v616
        %v1106 = vsub.f32 %v962, %v617
        %v1107 = vsub.f32 %v963, %v618
        %v1108 = vsub.f32 %v964, %v619
        %v1109 = vsub.f32 %v965, %v620
        %v1110 = vsub.f32 %v966, %v621
        %v1111 = vsub.f32 %v967, %v622
        %v1112 = vsub.f32 %v968, %v623
        %v1113 = vsub.f32 %v969, %v624
        %v1114 = vsub.f32 %v970, %v625
        %v1115 = vsub.f32 %v971, %v626
        %v1116 = vsub.f32 %v972, %v627
        %v1117 = vsub.f32 %v973, %v628
        %v1118 = vsub.f32 %v974, %v629
        %v1119 = vsub.f32 %v975, %v630
        %v1120 = vsub.f32 %v976, %v631
        %v1121 = vsub.f32 %v1025, %v1059
        %v1122 = vsub.f32 %v1026, %v1062
        %v1123 = vsub.f32 %v1027, %v1065
        %v1124 = vsub.f32 %v1028, %v1068
        %v1125 = vsub.f32 %v1029, %v1071
        %v1126 = vsub.f32 %v1030, %v1074
        %v1127 = vsub.f32 %v1031, %v1077
        %v1128 = vsub.f32 %v1032, %v1080
        %v1129 = vsub.f32 %v1033, %v1083
        %v1130 = vsub.f32 %v1034, %v1086
        %v1131 = vsub.f32 %v1035, %v1089
        %v1132 = vsub.f32 %v1036, %v1092
        %v1133 = vsub.f32 %v1037, %v1095
        %v1134 = vsub.f32 %v1038, %v1098
        %v1135 = vsub.f32 %v1039, %v1101
        %v1136 = vsub.f32 %v1040, %v1104
        %v1137 = vmul.f32 %v961, %v1121
        %v1138 = vmul.f32 %v962, %v1122
        %v1139 = vmul.f32 %v963, %v1123
        %v1140 = vmul.f32 %v964, %v1124
        %v1141 = vmul.f32 %v965, %v1125
        %v1142 = vmul.f32 %v966, %v1126
        %v1143 = vmul.f32 %v967, %v1127
        %v1144 = vmul.f32 %v968, %v1128
        %v1145 = vmul.f32 %v969, %v1129
        %v1146 = vmul.f32 %v970, %v1130
        %v1147 = vmul.f32 %v971, %v1131
        %v1148 = vmul.f32 %v972, %v1132
        %v1149 = vmul.f32 %v973, %v1133
        %v1150 = vmul.f32 %v974, %v1134
        %v1151 = vmul.f32 %v975, %v1135
        %v1152 = vmul.f32 %v976, %v1136
        %v1153 = vadd.f32 %v1105, %v1137
        %v1154 = vadd.f32 %v1106, %v1138
        %v1155 = vadd.f32 %v1107, %v1139
        %v1156 = vadd.f32 %v1108, %v1140
        %v1157 = vadd.f32 %v1109, %v1141
        %v1158 = vadd.f32 %v1110, %v1142
        %v1159 = vadd.f32 %v1111, %v1143
        %v1160 = vadd.f32 %v1112, %v1144
        %v1161 = vadd.f32 %v1113, %v1145
        %v1162 = vadd.f32 %v1114, %v1146
        %v1163 = vadd.f32 %v1115, %v1147
        %v1164 = vadd.f32 %v1116, %v1148
        %v1165 = vadd.f32 %v1117, %v1149
        %v1166 = vadd.f32 %v1118, %v1150
        %v1167 = vadd.f32 %v1119, %v1151
        %v1168 = vadd.f32 %v1120, %v1152
        %v1169 = vpack.c.bf16 %v1154, %v1153
        %v1170 = vpack.c.bf16 %v1156, %v1155
        %v1171 = vpack.c.bf16 %v1158, %v1157
        %v1172 = vpack.c.bf16 %v1160, %v1159
        %v1173 = vpack.c.bf16 %v1162, %v1161
        %v1174 = vpack.c.bf16 %v1164, %v1163
        %v1175 = vpack.c.bf16 %v1166, %v1165
        %v1176 = vpack.c.bf16 %v1168, %v1167
        %v1178 = vsel %vm455, %v1169, 0
        %v1181 = vsel %vm455, %v1170, 0
        %v1184 = vsel %vm455, %v1171, 0
        %v1187 = vsel %vm455, %v1172, 0
        %v1190 = vsel %vm455, %v1173, 0
        %v1193 = vsel %vm455, %v1174, 0
        %v1196 = vsel %vm455, %v1175, 0
        %v1199 = vsel %vm455, %v1176, 0
        %vm1201 = vcmask 1043456
        %v1203 = vsel %vm1201, %v343, 0
        %1205 = vmatprep.subr.bf16.mxu0 0
        %1206 = vmatpush1.bf16.msra.mxu0 %v1203
        %1207 = vmatprep.subr.bf16.mxu0 0
        %1208 = vmatpush1.bf16.msra.mxu0 0
        %1209 = vmatprep.subr.bf16.mxu0 0
        %1210 = vmatpush1.bf16.msra.mxu0 0
        %1211 = vmatprep.subr.bf16.mxu0 0
        %1212 = vmatpush1.bf16.msra.mxu0 0
        %1213 = vmatprep.subr.bf16.mxu0 0
        %1214 = vmatpush1.bf16.msra.mxu0 0
        %1215 = vmatprep.subr.bf16.mxu0 0
        %1216 = vmatpush1.bf16.msra.mxu0 0
        %1217 = vmatprep.subr.bf16.mxu0 0
        %1218 = vmatpush1.bf16.msra.mxu0 0
        %1219 = vmatprep.subr.bf16.mxu0 0
        %1220 = vmatpush1.bf16.msra.mxu0 0
        %1221 = vmatprep.subr.bf16.mxu0 0
        %1222 = vmatpush1.bf16.msra.mxu0 0
        %1223 = vmatprep.subr.bf16.mxu0 0
        %1224 = vmatpush1.bf16.msra.mxu0 0
        %1225 = vmatprep.subr.bf16.mxu0 0
        %1226 = vmatpush1.bf16.msra.mxu0 0
        %1227 = vmatprep.subr.bf16.mxu0 0
        %1228 = vmatpush1.bf16.msra.mxu0 0
        %1229 = vmatprep.subr.bf16.mxu0 0
        %1230 = vmatpush1.bf16.msra.mxu0 0
        %1231 = vmatprep.subr.bf16.mxu0 0
        %1232 = vmatpush1.bf16.msra.mxu0 0
        %1233 = vmatprep.subr.bf16.mxu0 0
        %1234 = vmatpush1.bf16.msra.mxu0 0
        %1235 = vmatprep.subr.bf16.mxu0 0
        %1236 = vmatpush1.bf16.msra.mxu0 0
        %1237 = vmatprep.mubr.bf16.mxu0 0
        %1238 = vmatmul.mubr.bf16.gmra.mrb[0].mxu0 %v1178
        %v1239 = vpop.f32.mrb[0].mxu0
        %v1240 = vadd.f32 0.0, %v1239
        %v1241 = vpop.f32.mrb[0].mxu0
        %v1242 = vpop.f32.mrb[0].mxu0
        %v1243 = vadd.f32 0.0, %v1242
        %v1244 = vpop.f32.mrb[0].mxu0
        %1245 = vmatprep.mubr.bf16.mxu0 0
        %1246 = vmatmul.mubr.bf16.gmra.mrb[0].mxu0 %v1181
        %v1247 = vpop.f32.mrb[0].mxu0
        %v1248 = vadd.f32 0.0, %v1247
        %v1249 = vpop.f32.mrb[0].mxu0
        %v1250 = vpop.f32.mrb[0].mxu0
        %v1251 = vadd.f32 0.0, %v1250
        %v1252 = vpop.f32.mrb[0].mxu0
        %1253 = vmatprep.mubr.bf16.mxu0 0
        %1254 = vmatmul.mubr.bf16.gmra.mrb[0].mxu0 %v1184
        %v1255 = vpop.f32.mrb[0].mxu0
        %v1256 = vadd.f32 0.0, %v1255
        %v1257 = vpop.f32.mrb[0].mxu0
        %v1258 = vpop.f32.mrb[0].mxu0
        %v1259 = vadd.f32 0.0, %v1258
        %v1260 = vpop.f32.mrb[0].mxu0
        %1261 = vmatprep.mubr.bf16.mxu0 0
        %1262 = vmatmul.mubr.bf16.gmra.mrb[0].mxu0 %v1187
        %v1263 = vpop.f32.mrb[0].mxu0
        %v1264 = vadd.f32 0.0, %v1263
        %v1265 = vpop.f32.mrb[0].mxu0
        %v1266 = vpop.f32.mrb[0].mxu0
        %v1267 = vadd.f32 0.0, %v1266
        %v1268 = vpop.f32.mrb[0].mxu0
        %1269 = vmatprep.mubr.bf16.mxu0 0
        %1270 = vmatmul.mubr.bf16.gmra.mrb[0].mxu0 %v1190
        %v1271 = vpop.f32.mrb[0].mxu0
        %v1272 = vadd.f32 0.0, %v1271
        %v1273 = vpop.f32.mrb[0].mxu0
        %v1274 = vpop.f32.mrb[0].mxu0
        %v1275 = vadd.f32 0.0, %v1274
        %v1276 = vpop.f32.mrb[0].mxu0
        %1277 = vmatprep.mubr.bf16.mxu0 0
        %1278 = vmatmul.mubr.bf16.gmra.mrb[0].mxu0 %v1193
        %v1279 = vpop.f32.mrb[0].mxu0
        %v1280 = vadd.f32 0.0, %v1279
        %v1281 = vpop.f32.mrb[0].mxu0
        %v1282 = vpop.f32.mrb[0].mxu0
        %v1283 = vadd.f32 0.0, %v1282
        %v1284 = vpop.f32.mrb[0].mxu0
        %1285 = vmatprep.mubr.bf16.mxu0 0
        %1286 = vmatmul.mubr.bf16.gmra.mrb[0].mxu0 %v1196
        %v1287 = vpop.f32.mrb[0].mxu0
        %v1288 = vadd.f32 0.0, %v1287
        %v1289 = vpop.f32.mrb[0].mxu0
        %v1290 = vpop.f32.mrb[0].mxu0
        %v1291 = vadd.f32 0.0, %v1290
        %v1292 = vpop.f32.mrb[0].mxu0
        %1293 = vmatprep.mubr.bf16.mxu0 0
        %1294 = vmatmul.mubr.bf16.gmra.mrb[0].mxu0 %v1199
        %v1295 = vpop.f32.mrb[0].mxu0
        %v1296 = vadd.f32 0.0, %v1295
        %v1297 = vpop.f32.mrb[0].mxu0
        %v1298 = vpop.f32.mrb[0].mxu0
        %v1299 = vadd.f32 0.0, %v1298
        %v1300 = vpop.f32.mrb[0].mxu0
        %1301 = vdwg.mxu0
        %v1302 = vmul.f32 %v1240, 0.001
        %v1303 = vmul.f32 %v1243, 0.001
        %v1304 = vmul.f32 %v1248, 0.001
        %v1305 = vmul.f32 %v1251, 0.001
        %v1306 = vmul.f32 %v1256, 0.001
        %v1307 = vmul.f32 %v1259, 0.001
        %v1308 = vmul.f32 %v1264, 0.001
        %v1309 = vmul.f32 %v1267, 0.001
        %v1310 = vmul.f32 %v1272, 0.001
        %v1311 = vmul.f32 %v1275, 0.001
        %v1312 = vmul.f32 %v1280, 0.001
        %v1313 = vmul.f32 %v1283, 0.001
        %v1314 = vmul.f32 %v1288, 0.001
        %v1315 = vmul.f32 %v1291, 0.001
        %v1316 = vmul.f32 %v1296, 0.001
        %v1317 = vmul.f32 %v1299, 0.001
        %v1318 = vadd.f32 %v301, %v1302
        %v1319 = vadd.f32 %v302, %v1303
        %v1320 = vadd.f32 %v303, %v1304
        %v1321 = vadd.f32 %v304, %v1305
        %v1322 = vadd.f32 %v305, %v1306
        %v1323 = vadd.f32 %v306, %v1307
        %v1324 = vadd.f32 %v307, %v1308
        %v1325 = vadd.f32 %v308, %v1309
        %v1326 = vadd.f32 %v309, %v1310
        %v1327 = vadd.f32 %v310, %v1311
        %v1328 = vadd.f32 %v311, %v1312
        %v1329 = vadd.f32 %v312, %v1313
        %v1330 = vadd.f32 %v313, %v1314
        %v1331 = vadd.f32 %v314, %v1315
        %v1332 = vadd.f32 %v315, %v1316
        %v1333 = vadd.f32 %v316, %v1317
        %v1334 = vand.u32 2147483647, %v1318
        %v1335 = vand.u32 2147483647, %v1319
        %v1336 = vand.u32 2147483647, %v1320
        %v1337 = vand.u32 2147483647, %v1321
        %v1338 = vand.u32 2147483647, %v1322
        %v1339 = vand.u32 2147483647, %v1323
        %v1340 = vand.u32 2147483647, %v1324
        %v1341 = vand.u32 2147483647, %v1325
        %v1342 = vand.u32 2147483647, %v1326
        %v1343 = vand.u32 2147483647, %v1327
        %v1344 = vand.u32 2147483647, %v1328
        %v1345 = vand.u32 2147483647, %v1329
        %v1346 = vand.u32 2147483647, %v1330
        %v1347 = vand.u32 2147483647, %v1331
        %v1348 = vand.u32 2147483647, %v1332
        %v1349 = vand.u32 2147483647, %v1333
        %1350 = vmax.xlane.f32.xlu0 %v1334
        %v1351 = vpop.xlane.xlu0 %1350
        %1352 = vmax.xlane.f32.xlu0 %v1335
        %v1353 = vpop.xlane.xlu0 %1352
        %1354 = vmax.xlane.f32.xlu0 %v1336
        %v1355 = vpop.xlane.xlu0 %1354
        %1356 = vmax.xlane.f32.xlu0 %v1337
        %v1357 = vpop.xlane.xlu0 %1356
        %1358 = vmax.xlane.f32.xlu0 %v1338
        %v1359 = vpop.xlane.xlu0 %1358
        %1360 = vmax.xlane.f32.xlu0 %v1339
        %v1361 = vpop.xlane.xlu0 %1360
        %1362 = vmax.xlane.f32.xlu0 %v1340
        %v1363 = vpop.xlane.xlu0 %1362
        %1364 = vmax.xlane.f32.xlu0 %v1341
        %v1365 = vpop.xlane.xlu0 %1364
        %1366 = vmax.xlane.f32.xlu0 %v1342
        %v1367 = vpop.xlane.xlu0 %1366
        %1368 = vmax.xlane.f32.xlu0 %v1343
        %v1369 = vpop.xlane.xlu0 %1368
        %1370 = vmax.xlane.f32.xlu0 %v1344
        %v1371 = vpop.xlane.xlu0 %1370
        %1372 = vmax.xlane.f32.xlu0 %v1345
        %v1373 = vpop.xlane.xlu0 %1372
        %1374 = vmax.xlane.f32.xlu0 %v1346
        %v1375 = vpop.xlane.xlu0 %1374
        %1376 = vmax.xlane.f32.xlu0 %v1347
        %v1377 = vpop.xlane.xlu0 %1376
        %1378 = vmax.xlane.f32.xlu0 %v1348
        %v1379 = vpop.xlane.xlu0 %1378
        %1380 = vmax.xlane.f32.xlu0 %v1349
        %v1381 = vpop.xlane.xlu0 %1380
        %v1382 = vadd.f32 %v1351, 1e-06
        %v1383 = vadd.f32 %v1353, 1e-06
        %v1384 = vadd.f32 %v1355, 1e-06
        %v1385 = vadd.f32 %v1357, 1e-06
        %v1386 = vadd.f32 %v1359, 1e-06
        %v1387 = vadd.f32 %v1361, 1e-06
        %v1388 = vadd.f32 %v1363, 1e-06
        %v1389 = vadd.f32 %v1365, 1e-06
        %v1390 = vadd.f32 %v1367, 1e-06
        %v1391 = vadd.f32 %v1369, 1e-06
        %v1392 = vadd.f32 %v1371, 1e-06
        %v1393 = vadd.f32 %v1373, 1e-06
        %v1394 = vadd.f32 %v1375, 1e-06
        %v1395 = vadd.f32 %v1377, 1e-06
        %v1396 = vadd.f32 %v1379, 1e-06
        %v1397 = vadd.f32 %v1381, 1e-06
        %v1398 = vrcp.pop %v1382
        %v1399 = vrcp.pop %v1383
        %v1400 = vrcp.pop %v1384
        %v1401 = vrcp.pop %v1385
        %v1402 = vrcp.pop %v1386
        %v1403 = vrcp.pop %v1387
        %v1404 = vrcp.pop %v1388
        %v1405 = vrcp.pop %v1389
        %v1406 = vrcp.pop %v1390
        %v1407 = vrcp.pop %v1391
        %v1408 = vrcp.pop %v1392
        %v1409 = vrcp.pop %v1393
        %v1410 = vrcp.pop %v1394
        %v1411 = vrcp.pop %v1395
        %v1412 = vrcp.pop %v1396
        %v1413 = vrcp.pop %v1397
        %v1414 = vmul.f32 %v1318, %v1398
        %v1415 = vmul.f32 %v1319, %v1399
        %v1416 = vmul.f32 %v1320, %v1400
        %v1417 = vmul.f32 %v1321, %v1401
        %v1418 = vmul.f32 %v1322, %v1402
        %v1419 = vmul.f32 %v1323, %v1403
        %v1420 = vmul.f32 %v1324, %v1404
        %v1421 = vmul.f32 %v1325, %v1405
        %v1422 = vmul.f32 %v1326, %v1406
        %v1423 = vmul.f32 %v1327, %v1407
        %v1424 = vmul.f32 %v1328, %v1408
        %v1425 = vmul.f32 %v1329, %v1409
        %v1426 = vmul.f32 %v1330, %v1410
        %v1427 = vmul.f32 %v1331, %v1411
        %v1428 = vmul.f32 %v1332, %v1412
        %v1429 = vmul.f32 %v1333, %v1413
        %v1430 = vpack.c.bf16 %v1415, %v1414
        %v1431 = vpack.c.bf16 %v1417, %v1416
        %v1432 = vpack.c.bf16 %v1419, %v1418
        %v1433 = vpack.c.bf16 %v1421, %v1420
        %v1434 = vpack.c.bf16 %v1423, %v1422
        %v1435 = vpack.c.bf16 %v1425, %v1424
        %v1436 = vpack.c.bf16 %v1427, %v1426
        %v1437 = vpack.c.bf16 %v1429, %v1428
        %1438 = vmatprep.subr.bf16.mxu0 0
        %1439 = vmatpush1.bf16.msra.mxu0 %v335
        %1440 = vmatprep.subr.bf16.mxu0 0
        %1441 = vmatpush1.bf16.msra.mxu0 %v336
        %1442 = vmatprep.subr.bf16.mxu0 0
        %1443 = vmatpush1.bf16.msra.mxu0 %v337
        %1444 = vmatprep.subr.bf16.mxu0 0
        %1445 = vmatpush1.bf16.msra.mxu0 %v338
        %1446 = vmatprep.subr.bf16.mxu0 0
        %1447 = vmatpush1.bf16.msra.mxu0 %v339
        %1448 = vmatprep.subr.bf16.mxu0 0
        %1449 = vmatpush1.bf16.msra.mxu0 %v340
        %1450 = vmatprep.subr.bf16.mxu0 0
        %1451 = vmatpush1.bf16.msra.mxu0 %v341
        %1452 = vmatprep.subr.bf16.mxu0 0
        %1453 = vmatpush1.bf16.msra.mxu0 %v342
        %1454 = vmatprep.subr.bf16.mxu0 0
        %1455 = vmatpush1.bf16.msra.mxu0 0
        %1456 = vmatprep.subr.bf16.mxu0 0
        %1457 = vmatpush1.bf16.msra.mxu0 0
        %1458 = vmatprep.subr.bf16.mxu0 0
        %1459 = vmatpush1.bf16.msra.mxu0 0
        %1460 = vmatprep.subr.bf16.mxu0 0
        %1461 = vmatpush1.bf16.msra.mxu0 0
        %1462 = vmatprep.subr.bf16.mxu0 0
        %1463 = vmatpush1.bf16.msra.mxu0 0
        %1464 = vmatprep.subr.bf16.mxu0 0
        %1465 = vmatpush1.bf16.msra.mxu0 0
        %1466 = vmatprep.subr.bf16.mxu0 0
        %1467 = vmatpush1.bf16.msra.mxu0 0
        %1468 = vmatprep.subr.bf16.mxu0 0
        %1469 = vmatpush1.bf16.msra.mxu0 0
        %1470 = vmatprep.mubr.bf16.mxu0 0
        %1471 = vmatmul.mubr.bf16.gmra.mrb[0].mxu0 %v1430
        %v1472 = vpop.f32.mrb[0].mxu0
        %v1473 = vadd.f32 0.0, %v1472
        %v1474 = vpop.f32.mrb[0].mxu0
        %v1475 = vpop.f32.mrb[0].mxu0
        %v1476 = vadd.f32 0.0, %v1475
        %v1477 = vpop.f32.mrb[0].mxu0
        %1478 = vmatprep.mubr.bf16.mxu0 0
        %1479 = vmatmul.mubr.bf16.gmra.mrb[0].mxu0 %v1431
        %v1480 = vpop.f32.mrb[0].mxu0
        %v1481 = vadd.f32 0.0, %v1480
        %v1482 = vpop.f32.mrb[0].mxu0
        %v1483 = vpop.f32.mrb[0].mxu0
        %v1484 = vadd.f32 0.0, %v1483
        %v1485 = vpop.f32.mrb[0].mxu0
        %1486 = vmatprep.mubr.bf16.mxu0 0
        %1487 = vmatmul.mubr.bf16.gmra.mrb[0].mxu0 %v1432
        %v1488 = vpop.f32.mrb[0].mxu0
        %v1489 = vadd.f32 0.0, %v1488
        %v1490 = vpop.f32.mrb[0].mxu0
        %v1491 = vpop.f32.mrb[0].mxu0
        %v1492 = vadd.f32 0.0, %v1491
        %v1493 = vpop.f32.mrb[0].mxu0
        %1494 = vmatprep.mubr.bf16.mxu0 0
        %1495 = vmatmul.mubr.bf16.gmra.mrb[0].mxu0 %v1433
        %v1496 = vpop.f32.mrb[0].mxu0
        %v1497 = vadd.f32 0.0, %v1496
        %v1498 = vpop.f32.mrb[0].mxu0
        %v1499 = vpop.f32.mrb[0].mxu0
        %v1500 = vadd.f32 0.0, %v1499
        %v1501 = vpop.f32.mrb[0].mxu0
        %1502 = vmatprep.mubr.bf16.mxu0 0
        %1503 = vmatmul.mubr.bf16.gmra.mrb[0].mxu0 %v1434
        %v1504 = vpop.f32.mrb[0].mxu0
        %v1505 = vadd.f32 0.0, %v1504
        %v1506 = vpop.f32.mrb[0].mxu0
        %v1507 = vpop.f32.mrb[0].mxu0
        %v1508 = vadd.f32 0.0, %v1507
        %v1509 = vpop.f32.mrb[0].mxu0
        %1510 = vmatprep.mubr.bf16.mxu0 0
        %1511 = vmatmul.mubr.bf16.gmra.mrb[0].mxu0 %v1435
        %v1512 = vpop.f32.mrb[0].mxu0
        %v1513 = vadd.f32 0.0, %v1512
        %v1514 = vpop.f32.mrb[0].mxu0
        %v1515 = vpop.f32.mrb[0].mxu0
        %v1516 = vadd.f32 0.0, %v1515
        %v1517 = vpop.f32.mrb[0].mxu0
        %1518 = vmatprep.mubr.bf16.mxu0 0
        %1519 = vmatmul.mubr.bf16.gmra.mrb[0].mxu0 %v1436
        %v1520 = vpop.f32.mrb[0].mxu0
        %v1521 = vadd.f32 0.0, %v1520
        %v1522 = vpop.f32.mrb[0].mxu0
        %v1523 = vpop.f32.mrb[0].mxu0
        %v1524 = vadd.f32 0.0, %v1523
        %v1525 = vpop.f32.mrb[0].mxu0
        %1526 = vmatprep.mubr.bf16.mxu0 0
        %1527 = vmatmul.mubr.bf16.gmra.mrb[0].mxu0 %v1437
        %v1528 = vpop.f32.mrb[0].mxu0
        %v1529 = vadd.f32 0.0, %v1528
        %v1530 = vpop.f32.mrb[0].mxu0
        %v1531 = vpop.f32.mrb[0].mxu0
        %v1532 = vadd.f32 0.0, %v1531
        %v1533 = vpop.f32.mrb[0].mxu0
        %1534 = vdwg.mxu0
        %v1535 = vadd.f32 %v393, %v1473
        %v1536 = vadd.f32 %v396, %v1476
        %v1537 = vadd.f32 %v401, %v1481
        %v1538 = vadd.f32 %v404, %v1484
        %v1539 = vadd.f32 %v409, %v1489
        %v1540 = vadd.f32 %v412, %v1492
        %v1541 = vadd.f32 %v417, %v1497
        %v1542 = vadd.f32 %v420, %v1500
        %v1543 = vadd.f32 %v425, %v1505
        %v1544 = vadd.f32 %v428, %v1508
        %v1545 = vadd.f32 %v433, %v1513
        %v1546 = vadd.f32 %v436, %v1516
        %v1547 = vadd.f32 %v441, %v1521
        %v1548 = vadd.f32 %v444, %v1524
        %v1549 = vadd.f32 %v449, %v1529
        %v1550 = vadd.f32 %v452, %v1532
        %v1551 = vsel %vm455, %v1535, -inf
        %1552 = vmax.xlane.f32.xlu0 %v1551
        %v1553 = vpop.xlane.xlu0 %1552
        %v1554 = vsel %vm455, %v1536, -inf
        %1555 = vmax.xlane.f32.xlu0 %v1554
        %v1556 = vpop.xlane.xlu0 %1555
        %v1557 = vsel %vm455, %v1537, -inf
        %1558 = vmax.xlane.f32.xlu0 %v1557
        %v1559 = vpop.xlane.xlu0 %1558
        %v1560 = vsel %vm455, %v1538, -inf
        %1561 = vmax.xlane.f32.xlu0 %v1560
        %v1562 = vpop.xlane.xlu0 %1561
        %v1563 = vsel %vm455, %v1539, -inf
        %1564 = vmax.xlane.f32.xlu0 %v1563
        %v1565 = vpop.xlane.xlu0 %1564
        %v1566 = vsel %vm455, %v1540, -inf
        %1567 = vmax.xlane.f32.xlu0 %v1566
        %v1568 = vpop.xlane.xlu0 %1567
        %v1569 = vsel %vm455, %v1541, -inf
        %1570 = vmax.xlane.f32.xlu0 %v1569
        %v1571 = vpop.xlane.xlu0 %1570
        %v1572 = vsel %vm455, %v1542, -inf
        %1573 = vmax.xlane.f32.xlu0 %v1572
        %v1574 = vpop.xlane.xlu0 %1573
        %v1575 = vsel %vm455, %v1543, -inf
        %1576 = vmax.xlane.f32.xlu0 %v1575
        %v1577 = vpop.xlane.xlu0 %1576
        %v1578 = vsel %vm455, %v1544, -inf
        %1579 = vmax.xlane.f32.xlu0 %v1578
        %v1580 = vpop.xlane.xlu0 %1579
        %v1581 = vsel %vm455, %v1545, -inf
        %1582 = vmax.xlane.f32.xlu0 %v1581
        %v1583 = vpop.xlane.xlu0 %1582
        %v1584 = vsel %vm455, %v1546, -inf
        %1585 = vmax.xlane.f32.xlu0 %v1584
        %v1586 = vpop.xlane.xlu0 %1585
        %v1587 = vsel %vm455, %v1547, -inf
        %1588 = vmax.xlane.f32.xlu0 %v1587
        %v1589 = vpop.xlane.xlu0 %1588
        %v1590 = vsel %vm455, %v1548, -inf
        %1591 = vmax.xlane.f32.xlu0 %v1590
        %v1592 = vpop.xlane.xlu0 %1591
        %v1593 = vsel %vm455, %v1549, -inf
        %1594 = vmax.xlane.f32.xlu0 %v1593
        %v1595 = vpop.xlane.xlu0 %1594
        %v1596 = vsel %vm455, %v1550, -inf
        %1597 = vmax.xlane.f32.xlu0 %v1596
        %v1598 = vpop.xlane.xlu0 %1597
        %v1599 = vsub.f32 %v1535, %v1553
        %v1600 = vsub.f32 %v1536, %v1556
        %v1601 = vsub.f32 %v1537, %v1559
        %v1602 = vsub.f32 %v1538, %v1562
        %v1603 = vsub.f32 %v1539, %v1565
        %v1604 = vsub.f32 %v1540, %v1568
        %v1605 = vsub.f32 %v1541, %v1571
        %v1606 = vsub.f32 %v1542, %v1574
        %v1607 = vsub.f32 %v1543, %v1577
        %v1608 = vsub.f32 %v1544, %v1580
        %v1609 = vsub.f32 %v1545, %v1583
        %v1610 = vsub.f32 %v1546, %v1586
        %v1611 = vsub.f32 %v1547, %v1589
        %v1612 = vsub.f32 %v1548, %v1592
        %v1613 = vsub.f32 %v1549, %v1595
        %v1614 = vsub.f32 %v1550, %v1598
        %v1615 = vmul.f32 %v1599, 1.442695
        %v1616 = vpow.pop %v1615
        %v1617 = vmul.f32 %v1600, 1.442695
        %v1618 = vpow.pop %v1617
        %v1619 = vmul.f32 %v1601, 1.442695
        %v1620 = vpow.pop %v1619
        %v1621 = vmul.f32 %v1602, 1.442695
        %v1622 = vpow.pop %v1621
        %v1623 = vmul.f32 %v1603, 1.442695
        %v1624 = vpow.pop %v1623
        %v1625 = vmul.f32 %v1604, 1.442695
        %v1626 = vpow.pop %v1625
        %v1627 = vmul.f32 %v1605, 1.442695
        %v1628 = vpow.pop %v1627
        %v1629 = vmul.f32 %v1606, 1.442695
        %v1630 = vpow.pop %v1629
        %v1631 = vmul.f32 %v1607, 1.442695
        %v1632 = vpow.pop %v1631
        %v1633 = vmul.f32 %v1608, 1.442695
        %v1634 = vpow.pop %v1633
        %v1635 = vmul.f32 %v1609, 1.442695
        %v1636 = vpow.pop %v1635
        %v1637 = vmul.f32 %v1610, 1.442695
        %v1638 = vpow.pop %v1637
        %v1639 = vmul.f32 %v1611, 1.442695
        %v1640 = vpow.pop %v1639
        %v1641 = vmul.f32 %v1612, 1.442695
        %v1642 = vpow.pop %v1641
        %v1643 = vmul.f32 %v1613, 1.442695
        %v1644 = vpow.pop %v1643
        %v1645 = vmul.f32 %v1614, 1.442695
        %v1646 = vpow.pop %v1645
        %v1647 = vsel %vm455, %v1616, 0.0
        %1648 = vadd.xlane.f32.xlu0 %v1647
        %v1649 = vpop.xlane.xlu0 %1648
        %v1650 = vsel %vm455, %v1618, 0.0
        %1651 = vadd.xlane.f32.xlu0 %v1650
        %v1652 = vpop.xlane.xlu0 %1651
        %v1653 = vsel %vm455, %v1620, 0.0
        %1654 = vadd.xlane.f32.xlu0 %v1653
        %v1655 = vpop.xlane.xlu0 %1654
        %v1656 = vsel %vm455, %v1622, 0.0
        %1657 = vadd.xlane.f32.xlu0 %v1656
        %v1658 = vpop.xlane.xlu0 %1657
        %v1659 = vsel %vm455, %v1624, 0.0
        %1660 = vadd.xlane.f32.xlu0 %v1659
        %v1661 = vpop.xlane.xlu0 %1660
        %v1662 = vsel %vm455, %v1626, 0.0
        %1663 = vadd.xlane.f32.xlu0 %v1662
        %v1664 = vpop.xlane.xlu0 %1663
        %v1665 = vsel %vm455, %v1628, 0.0
        %1666 = vadd.xlane.f32.xlu0 %v1665
        %v1667 = vpop.xlane.xlu0 %1666
        %v1668 = vsel %vm455, %v1630, 0.0
        %1669 = vadd.xlane.f32.xlu0 %v1668
        %v1670 = vpop.xlane.xlu0 %1669
        %v1671 = vsel %vm455, %v1632, 0.0
        %1672 = vadd.xlane.f32.xlu0 %v1671
        %v1673 = vpop.xlane.xlu0 %1672
        %v1674 = vsel %vm455, %v1634, 0.0
        %1675 = vadd.xlane.f32.xlu0 %v1674
        %v1676 = vpop.xlane.xlu0 %1675
        %v1677 = vsel %vm455, %v1636, 0.0
        %1678 = vadd.xlane.f32.xlu0 %v1677
        %v1679 = vpop.xlane.xlu0 %1678
        %v1680 = vsel %vm455, %v1638, 0.0
        %1681 = vadd.xlane.f32.xlu0 %v1680
        %v1682 = vpop.xlane.xlu0 %1681
        %v1683 = vsel %vm455, %v1640, 0.0
        %1684 = vadd.xlane.f32.xlu0 %v1683
        %v1685 = vpop.xlane.xlu0 %1684
        %v1686 = vsel %vm455, %v1642, 0.0
        %1687 = vadd.xlane.f32.xlu0 %v1686
        %v1688 = vpop.xlane.xlu0 %1687
        %v1689 = vsel %vm455, %v1644, 0.0
        %1690 = vadd.xlane.f32.xlu0 %v1689
        %v1691 = vpop.xlane.xlu0 %1690
        %v1692 = vsel %vm455, %v1646, 0.0
        %1693 = vadd.xlane.f32.xlu0 %v1692
        %v1694 = vpop.xlane.xlu0 %1693
        %v1695 = vrcp.pop %v1649
        %v1696 = vrcp.pop %v1652
        %v1697 = vrcp.pop %v1655
        %v1698 = vrcp.pop %v1658
        %v1699 = vrcp.pop %v1661
        %v1700 = vrcp.pop %v1664
        %v1701 = vrcp.pop %v1667
        %v1702 = vrcp.pop %v1670
        %v1703 = vrcp.pop %v1673
        %v1704 = vrcp.pop %v1676
        %v1705 = vrcp.pop %v1679
        %v1706 = vrcp.pop %v1682
        %v1707 = vrcp.pop %v1685
        %v1708 = vrcp.pop %v1688
        %v1709 = vrcp.pop %v1691
        %v1710 = vrcp.pop %v1694
        %v1711 = vmul.f32 %v1616, %v1695
        %v1712 = vmul.f32 %v1618, %v1696
        %v1713 = vmul.f32 %v1620, %v1697
        %v1714 = vmul.f32 %v1622, %v1698
        %v1715 = vmul.f32 %v1624, %v1699
        %v1716 = vmul.f32 %v1626, %v1700
        %v1717 = vmul.f32 %v1628, %v1701
        %v1718 = vmul.f32 %v1630, %v1702
        %v1719 = vmul.f32 %v1632, %v1703
        %v1720 = vmul.f32 %v1634, %v1704
        %v1721 = vmul.f32 %v1636, %v1705
        %v1722 = vmul.f32 %v1638, %v1706
        %v1723 = vmul.f32 %v1640, %v1707
        %v1724 = vmul.f32 %v1642, %v1708
        %v1725 = vmul.f32 %v1644, %v1709
        %v1726 = vmul.f32 %v1646, %v1710
        %v1727 = vlog2.pop %v1649
        %v1728 = vmul.f32 %v1727, 0.6931472
        %v1729 = vlog2.pop %v1652
        %v1730 = vmul.f32 %v1729, 0.6931472
        %v1731 = vlog2.pop %v1655
        %v1732 = vmul.f32 %v1731, 0.6931472
        %v1733 = vlog2.pop %v1658
        %v1734 = vmul.f32 %v1733, 0.6931472
        %v1735 = vlog2.pop %v1661
        %v1736 = vmul.f32 %v1735, 0.6931472
        %v1737 = vlog2.pop %v1664
        %v1738 = vmul.f32 %v1737, 0.6931472
        %v1739 = vlog2.pop %v1667
        %v1740 = vmul.f32 %v1739, 0.6931472
        %v1741 = vlog2.pop %v1670
        %v1742 = vmul.f32 %v1741, 0.6931472
        %v1743 = vlog2.pop %v1673
        %v1744 = vmul.f32 %v1743, 0.6931472
        %v1745 = vlog2.pop %v1676
        %v1746 = vmul.f32 %v1745, 0.6931472
        %v1747 = vlog2.pop %v1679
        %v1748 = vmul.f32 %v1747, 0.6931472
        %v1749 = vlog2.pop %v1682
        %v1750 = vmul.f32 %v1749, 0.6931472
        %v1751 = vlog2.pop %v1685
        %v1752 = vmul.f32 %v1751, 0.6931472
        %v1753 = vlog2.pop %v1688
        %v1754 = vmul.f32 %v1753, 0.6931472
        %v1755 = vlog2.pop %v1691
        %v1756 = vmul.f32 %v1755, 0.6931472
        %v1757 = vlog2.pop %v1694
        %v1758 = vmul.f32 %v1757, 0.6931472
        %v1759 = vsub.f32 %v1599, %v1728
        %v1760 = vsub.f32 %v1600, %v1730
        %v1761 = vsub.f32 %v1601, %v1732
        %v1762 = vsub.f32 %v1602, %v1734
        %v1763 = vsub.f32 %v1603, %v1736
        %v1764 = vsub.f32 %v1604, %v1738
        %v1765 = vsub.f32 %v1605, %v1740
        %v1766 = vsub.f32 %v1606, %v1742
        %v1767 = vsub.f32 %v1607, %v1744
        %v1768 = vsub.f32 %v1608, %v1746
        %v1769 = vsub.f32 %v1609, %v1748
        %v1770 = vsub.f32 %v1610, %v1750
        %v1771 = vsub.f32 %v1611, %v1752
        %v1772 = vsub.f32 %v1612, %v1754
        %v1773 = vsub.f32 %v1613, %v1756
        %v1774 = vsub.f32 %v1614, %v1758
        %v1775 = vsub.f32 %v1759, %v664
        %v1776 = vsub.f32 %v1760, %v665
        %v1777 = vsub.f32 %v1761, %v666
        %v1778 = vsub.f32 %v1762, %v667
        %v1779 = vsub.f32 %v1763, %v668
        %v1780 = vsub.f32 %v1764, %v669
        %v1781 = vsub.f32 %v1765, %v670
        %v1782 = vsub.f32 %v1766, %v671
        %v1783 = vsub.f32 %v1767, %v672
        %v1784 = vsub.f32 %v1768, %v673
        %v1785 = vsub.f32 %v1769, %v674
        %v1786 = vsub.f32 %v1770, %v675
        %v1787 = vsub.f32 %v1771, %v676
        %v1788 = vsub.f32 %v1772, %v677
        %v1789 = vsub.f32 %v1773, %v678
        %v1790 = vsub.f32 %v1774, %v679
        %v1791 = vsub.f32 %v1711, %v616
        %v1792 = vsub.f32 %v1712, %v617
        %v1793 = vsub.f32 %v1713, %v618
        %v1794 = vsub.f32 %v1714, %v619
        %v1795 = vsub.f32 %v1715, %v620
        %v1796 = vsub.f32 %v1716, %v621
        %v1797 = vsub.f32 %v1717, %v622
        %v1798 = vsub.f32 %v1718, %v623
        %v1799 = vsub.f32 %v1719, %v624
        %v1800 = vsub.f32 %v1720, %v625
        %v1801 = vsub.f32 %v1721, %v626
        %v1802 = vsub.f32 %v1722, %v627
        %v1803 = vsub.f32 %v1723, %v628
        %v1804 = vsub.f32 %v1724, %v629
        %v1805 = vsub.f32 %v1725, %v630
        %v1806 = vsub.f32 %v1726, %v631
        %v1807 = vmul.f32 %v1791, %v1775
        %v1808 = vmul.f32 %v1792, %v1776
        %v1809 = vmul.f32 %v1793, %v1777
        %v1810 = vmul.f32 %v1794, %v1778
        %v1811 = vmul.f32 %v1795, %v1779
        %v1812 = vmul.f32 %v1796, %v1780
        %v1813 = vmul.f32 %v1797, %v1781
        %v1814 = vmul.f32 %v1798, %v1782
        %v1815 = vmul.f32 %v1799, %v1783
        %v1816 = vmul.f32 %v1800, %v1784
        %v1817 = vmul.f32 %v1801, %v1785
        %v1818 = vmul.f32 %v1802, %v1786
        %v1819 = vmul.f32 %v1803, %v1787
        %v1820 = vmul.f32 %v1804, %v1788
        %v1821 = vmul.f32 %v1805, %v1789
        %v1822 = vmul.f32 %v1806, %v1790
        %v1823 = vsel %vm455, %v1807, 0.0
        %v1824 = vsel %vm455, %v1808, 0.0
        %v1825 = vadd.f32 %v1823, %v1824
        %v1826 = vsel %vm455, %v1809, 0.0
        %v1827 = vadd.f32 %v1825, %v1826
        %v1828 = vsel %vm455, %v1810, 0.0
        %v1829 = vadd.f32 %v1827, %v1828
        %v1830 = vsel %vm455, %v1811, 0.0
        %v1831 = vadd.f32 %v1829, %v1830
        %v1832 = vsel %vm455, %v1812, 0.0
        %v1833 = vadd.f32 %v1831, %v1832
        %v1834 = vsel %vm455, %v1813, 0.0
        %v1835 = vadd.f32 %v1833, %v1834
        %v1836 = vsel %vm455, %v1814, 0.0
        %v1837 = vadd.f32 %v1835, %v1836
        %v1838 = vsel %vm455, %v1815, 0.0
        %v1839 = vadd.f32 %v1837, %v1838
        %v1840 = vsel %vm455, %v1816, 0.0
        %v1841 = vadd.f32 %v1839, %v1840
        %v1842 = vsel %vm455, %v1817, 0.0
        %v1843 = vadd.f32 %v1841, %v1842
        %v1844 = vsel %vm455, %v1818, 0.0
        %v1845 = vadd.f32 %v1843, %v1844
        %v1846 = vsel %vm455, %v1819, 0.0
        %v1847 = vadd.f32 %v1845, %v1846
        %v1848 = vsel %vm455, %v1820, 0.0
        %v1849 = vadd.f32 %v1847, %v1848
        %v1850 = vsel %vm455, %v1821, 0.0
        %v1851 = vadd.f32 %v1849, %v1850
        %v1852 = vsel %vm455, %v1822, 0.0
        %v1853 = vadd.f32 %v1851, %v1852
        %1854 = vadd.xlane.f32.xlu0 %v1853
        %v1855 = vpop.xlane.xlu0 %1854
        %v1856 = vrot.slane %v1855, 4
        %v1857 = vadd.f32 %v1855, %v1856
        %v1858 = vrot.slane %v1857, 2
        %v1859 = vadd.f32 %v1857, %v1858
        %v1860 = vrot.slane %v1859, 1
        %v1861 = vadd.f32 %v1859, %v1860
        %s1862 = vtos %v1861
        %v1863 = vlaneseq
        %v1864 = vand.u32 %v1863, 127
        %vm1865 = vcmp.eq.s32.totalorder %v1864, 0
        %v1866 = vstv %s1862
        %v1867 = vsel %vm1865, %v1866, 0.0
        %1868 = vst [vmem:[%s281] sm:$0x1] %v1867
        %s1869 = sand.u32 %s148, 1
        %s1870 = scalar_lea.sflag [#allocation4], %s1869
        %s1871 = sand.u32 %s148, 1
        %s1872 = scalar_lea.vmem [#allocation7], %s1871
        // Predicated region
        $region49: #{tpu_custom_call.1} parent=39 // pred_check
          %p1873 = pneg %p158
        $region50: #{tpu_custom_call.1} parent=39 // pred_check_branch
          %1875 = sbr.rel (%p1873) target = $region52
        $region51: #{tpu_custom_call.1} parent=39 // pred_region
          %s1877 = ssub.s32 16, 16
          %1878 = vsyncadd %s1870, %s1877
          %s1879 = smul.addr %s25, 16
          %s1880 = scalar_lea.hbm %s5, %s1879
          %s1882 = sshll.u32 %s1872, 4
          %s1883 = int_to_ptr.vmem [resolvable:$true] %s1882
          %1885 = dma.vmem_to_hbm [thread:$0]  %s1883, 16, %s1880, %s1870
        $region52: #{tpu_custom_call.1} parent=39 // pred_fallthru
          _
      $region40: #{tpu_custom_call.1} parent=5 // pred_fallthru
        _
      %p1886 = scmp.le.s32.totalorder 2, %s20
      // Predicated region
      $region53: #{tpu_custom_call.1} parent=5 // pred_check
        %p1887 = pneg %p1886
      $region54: #{tpu_custom_call.1} parent=5 // pred_check_branch
        %1889 = sbr.rel (%p1887) target = $region56
      $region55: #{tpu_custom_call.1} parent=5 // pred_region
        %s1890 = ssub.s32 %s20, 2
        // Predicated region
        $region57: #{tpu_custom_call.1} parent=55 // pred_check
          %p1891 = pneg %p164
        $region58: #{tpu_custom_call.1} parent=55 // pred_check_branch
          %1893 = sbr.rel (%p1891) target = $region60
        $region59: #{tpu_custom_call.1} parent=55 // pred_region
          %s1894 = sand.u32 %s149, 1
          %s1895 = scalar_lea.sflag [#allocation4], %s1894
          %s1896 = sand.u32 %s149, 1
          %s1897 = scalar_lea.vmem [#allocation7], %s1896
          %1898 = dma.done %s1895, 16
        $region60: #{tpu_custom_call.1} parent=55 // pred_fallthru
          _
      $region56: #{tpu_custom_call.1} parent=5 // pred_fallthru
        _
    $region6: #{tpu_custom_call.1} parent=1 // loop_footer
      %s24 = sadd.s32 1, %s20
    $region7: #{tpu_custom_call.1} parent=1 // loop_footer_branch
      %19 = sbr.rel target = $region3
    $region8: #{tpu_custom_call.1} parent=1 // loop_exit
      _
    %1899 = vsyncpa [#allocation3], 1
    %s1900 = scalar_lea.sflag [#allocation3], 1
    %1901 = vsyncpa %s1900, 1
    %1902 = vsyncpa [#allocation6], 1
    %s1903 = scalar_lea.sflag [#allocation6], 1
    %1904 = vsyncpa %s1903, 1
    %1905 = vsyncpa [#allocation4], 1
    %s1906 = scalar_lea.sflag [#allocation4], 1
    %1907 = vsyncpa %s1906, 1

</llo_original>
